<compile_context>
chip_gen: v7x
topology: tpu7x:2x2x1
jax: 0.10.0
libtpu: 0.0.40
codegen_flags: <defaults>
</compile_context>

<pallas_src>
import functools

import jax
import jax.numpy as jnp
import numpy as np
from jax.experimental import pallas as pl
from jax.experimental.pallas import tpu as pltpu

HEAD_PAD = 128   # lane-dense width of the fused pi/v head output
Z_PAD = 128      # latent lanes padded to a full vreg lane width
E_PAD = 128      # embed lanes padded to a full vreg lane width


def _round_up(n, m=128):
    return ((n + m - 1) // m) * m


# ----------------------------------------------------------------------------
# Kernel: one grid step == one environment step of the rollout.
# ----------------------------------------------------------------------------
def _rollout_kernel(D, H, bias_off,
                    x_ref, eps_ref, embed_ref, hx_ref,
                    w_enc_ref, w_musig_ref, w_ih0_ref, *rest):
    """rest = ([w_ihr_ref] if D > 1) + [w_hh_ref, w_head_ref, bias_ref,
                                        head_ref, h_state_ref]."""
    if D > 1:
        w_ihr_ref, w_hh_ref, w_head_ref, bias_ref, head_ref, hstate_ref = rest
    else:
        w_hh_ref, w_head_ref, bias_ref, head_ref, hstate_ref = rest
        w_ihr_ref = None

    f32, bf16 = jnp.float32, jnp.bfloat16

    def b(name, width):
        off = bias_off[name]                       # static python int, 128-aligned
        return bias_ref[:, off:off + width]        # (1, width) f32

    # ---- recurrent-state init: copy hx into the resident output block -------
    @pl.when(pl.program_id(0) == 0)
    def _():
        hstate_ref[...] = hx_ref[...]

    # ---- encoder.encode + encoder.sample_latent (MLP VAE encoder) -----------
    enc_h = w_enc_ref.shape[1]
    h_enc = jnp.maximum(
        jnp.dot(x_ref[0], w_enc_ref[...], preferred_element_type=f32)
        + b("enc", enc_h), 0.0)
    musig = (jnp.dot(h_enc.astype(bf16), w_musig_ref[...],
                     preferred_element_type=f32) + b("musig", 2 * Z_PAD))
    # 128-lane aligned slices; padded lanes of eps are zero so latent stays 0
    # there, and the matching w_ih0 rows are zero as well.
    latent = musig[:, :Z_PAD] + jnp.exp(musig[:, Z_PAD:]) * eps_ref[0].astype(f32)

    # ---- torch.cat((latent, embed), dim=1) + D stacked nn.GRUCell ------------
    # The concat + first GRUCell input projection is a split matmul: padded
    # latent lanes hit rows [0:Z_PAD) of w_ih0, padded embed lanes hit rows
    # [Z_PAD:); numerically identical to the concat, no in-kernel concatenate.
    out_bf = None
    for d in range(D):
        h_prev = hstate_ref[d]                                   # (B, H) f32
        if d == 0:
            gi = (jnp.dot(latent.astype(bf16), w_ih0_ref[:Z_PAD, :],
                          preferred_element_type=f32)
                  + jnp.dot(embed_ref[0], w_ih0_ref[Z_PAD:, :],
                            preferred_element_type=f32)
                  + b("ih_0", 3 * H))
        else:
            gi = (jnp.dot(out_bf, w_ihr_ref[d - 1],
                          preferred_element_type=f32) + b(f"ih_{d}", 3 * H))
        gh = (jnp.dot(h_prev.astype(bf16), w_hh_ref[d],
                      preferred_element_type=f32) + b(f"hh_{d}", 3 * H))
        # PyTorch nn.GRUCell gate order: r, z, n  (gate math in f32)
        r = jax.nn.sigmoid(gi[:, :H] + gh[:, :H])
        z = jax.nn.sigmoid(gi[:, H:2 * H] + gh[:, H:2 * H])
        n = jnp.tanh(gi[:, 2 * H:] + r * gh[:, 2 * H:])
        out = (1.0 - z) * n + z * h_prev
        hstate_ref[d] = out            # carried across grid steps (resident)
        out_bf = out.astype(bf16)

    # ---- fused pi/v head: one matmul, one lane-dense unmasked store ----------
    head_ref[0] = (jnp.dot(out_bf, w_head_ref[...],
                           preferred_element_type=f32) + b("head", HEAD_PAD))


# ----------------------------------------------------------------------------
# One-time (per weight update) repack of PyTorch-layout params.
# ----------------------------------------------------------------------------
def prepare_params(params, *, C, Hs, Ws, D, lstm_size, latent, output_size):
    """Repack into the fused / bf16 / lane-aligned kernel layout. NOT on the
    per-step hot path."""
    assert output_size + 1 <= HEAD_PAD, "pi + v heads must fit in HEAD_PAD lanes"
    assert latent <= Z_PAD and (output_size + 2) <= E_PAD
    f32, bf16 = jnp.float32, jnp.bfloat16
    enc_hidden = params["w_enc"].shape[1]
    E = output_size + 2

    # (1) Fold the NHWC->NCHW permute into w_enc (row permutation, free here).
    w_enc = (params["w_enc"].reshape(C, Hs, Ws, enc_hidden)
             .transpose(1, 2, 0, 3).reshape(C * Hs * Ws, enc_hidden))

    # (2) Fused, lane-aligned mu / log-sigma projection: (enc_hidden, 2*Z_PAD).
    w_musig = jnp.zeros((enc_hidden, 2 * Z_PAD), f32)
    w_musig = w_musig.at[:, :latent].set(params["w_mu"])
    w_musig = w_musig.at[:, Z_PAD:Z_PAD + latent].set(params["w_sig"])
    b_musig = jnp.zeros((1, 2 * Z_PAD), f32)
    b_musig = b_musig.at[:, :latent].set(params["b_mu"])
    b_musig = b_musig.at[:, Z_PAD:Z_PAD + latent].set(params["b_sig"])

    # (3) Layer-0 input projection with lane-aligned split rows:
    #     rows [0:Z_PAD) multiply the padded latent, rows [Z_PAD:) the padded
    #     embed.  Padded rows are zero.
    w_ih0 = jnp.zeros((Z_PAD + E_PAD, 3 * lstm_size), f32)
    w_ih0 = w_ih0.at[:latent, :].set(params["w_ih_0"][:latent])
    w_ih0 = w_ih0.at[Z_PAD:Z_PAD + E, :].set(params["w_ih_0"][latent:latent + E])

    # Stack the remaining per-layer GRU weights (fewer, larger DMAs).
    w_ihr = (jnp.stack([params[f"w_ih_{d}"] for d in range(1, D)])
             if D > 1 else None)
    w_hh = jnp.stack([params[f"w_hh_{d}"] for d in range(D)])

    # (4) Fuse pi / v heads into one zero-padded lane-dense matrix.
    w_head = jnp.zeros((lstm_size, HEAD_PAD), f32)
    w_head = w_head.at[:, :output_size].set(params["w_pi"])
    w_head = w_head.at[:, output_size:output_size + 1].set(params["w_v"])
    b_head = jnp.zeros((1, HEAD_PAD), f32)
    b_head = b_head.at[:, :output_size].set(params["b_pi"])
    b_head = b_head.at[:, output_size:output_size + 1].set(params["b_v"])

    # (5) Pack every bias into a single (1, total) f32 slab, 128-lane aligned.
    segs = [("enc", params["b_enc"]), ("musig", b_musig)]
    for d in range(D):
        segs.append((f"ih_{d}", params[f"b_ih_{d}"]))
        segs.append((f"hh_{d}", params[f"b_hh_{d}"]))
    segs.append(("head", b_head))

    bias_off, chunks, off = {}, [], 0
    for name, seg in segs:
        w = seg.shape[1]
        wp = _round_up(w)
        bias_off[name] = off
        chunks.append(jnp.pad(seg.astype(f32), ((0, 0), (0, wp - w))))
        off += wp
    bias = jnp.concatenate(chunks, axis=1)

    prepped = dict(
        w_enc=w_enc.astype(bf16),
        w_musig=w_musig.astype(bf16),
        w_ih0=w_ih0.astype(bf16),
        w_ihr=None if w_ihr is None else w_ihr.astype(bf16),
        w_hh=w_hh.astype(bf16),
        w_head=w_head.astype(bf16),
        bias=bias,
    )
    return prepped, bias_off


# ----------------------------------------------------------------------------
# Wrappers
# ----------------------------------------------------------------------------
def gru_vae_policy_rollout(x, hx, embed, eps, prepped, bias_off, *,
                           D, lstm_size, latent, output_size):
    """T-step rollout: x (T,B,H,W,C) NHWC, hx (D,B,lstm), embed (T,B,E),
    eps (T,B,latent).  Returns (logits (T,B,A), values (T,B,1), h_new (D,B,lstm)).
    T=1 recovers the original single-step module forward."""
    T, B = x.shape[0], x.shape[1]
    bf16 = jnp.bfloat16
    B_pad = _round_up(B, 8)
    E = output_size + 2

    # Only a flatten here — the NCHW permute is folded into w_enc at prep time.
    # Pre-cast to bf16 and sublane-pad the batch to 8; lane-pad eps/embed to 128.
    x_flat = x.reshape(T, B, -1)
    x_flat = jnp.pad(x_flat, ((0, 0), (0, B_pad - B), (0, 0))).astype(bf16)
    eps_p = jnp.zeros((T, B_pad, Z_PAD), bf16).at[:, :B, :latent].set(
        eps.astype(bf16))
    embed_p = jnp.zeros((T, B_pad, E_PAD), bf16).at[:, :B, :E].set(
        embed.astype(bf16))
    hx_p = jnp.pad(hx, ((0, 0), (0, B_pad - B), (0, 0))).astype(jnp.float32)

    inputs = [x_flat, eps_p, embed_p, hx_p,
              prepped["w_enc"], prepped["w_musig"], prepped["w_ih0"]]
    if D > 1:
        inputs.append(prepped["w_ihr"])
    inputs += [prepped["w_hh"], prepped["w_head"], prepped["bias"]]

    def per_step(arr):
        nrest = arr.ndim - 1
        return pl.BlockSpec((1,) + tuple(arr.shape[1:]),
                            lambda t, _n=nrest: (t,) + (0,) * _n)

    def resident(arr):
        return pl.BlockSpec(tuple(arr.shape),
                            lambda t, _z=(0,) * arr.ndim: _z)

    in_specs = ([per_step(x_flat), per_step(eps_p), per_step(embed_p),
                 resident(hx_p)] + [resident(w) for w in inputs[4:]])

    out_shape = (jax.ShapeDtypeStruct((T, B_pad, HEAD_PAD), jnp.float32),
                 jax.ShapeDtypeStruct((D, B_pad, lstm_size), jnp.float32))
    out_specs = (pl.BlockSpec((1, B_pad, HEAD_PAD), lambda t: (t, 0, 0)),
                 # constant index_map -> resident recurrent-state accumulator
                 pl.BlockSpec((D, B_pad, lstm_size), lambda t: (0, 0, 0)))

    head, h_state = pl.pallas_call(
        functools.partial(_rollout_kernel, D, lstm_size, bias_off),
        grid=(T,),
        out_shape=out_shape,
        in_specs=in_specs,
        out_specs=out_specs,
        compiler_params=pltpu.CompilerParams(
            dimension_semantics=("arbitrary",),     # recurrence over time
            vmem_limit_bytes=8 * 1024 * 1024),
    )(*inputs)

    logits = head[:, :B, :output_size]
    value = head[:, :B, output_size:output_size + 1]
    h_new = h_state[:, :B, :]
    return logits, value, h_new


def gru_vae_policy_forward(x, hx, embed, eps, prepped, bias_off, **kw):
    """Single-step call with exactly the original module's forward signature."""
    logits, value, h_new = gru_vae_policy_rollout(
        x[None], hx, embed[None], eps[None], prepped, bias_off, **kw)
    return logits[0], value[0], h_new


# ----------------------------------------------------------------------------
# Pure-JAX reference (original layout: explicit permute + concat), bf16 weights
# with f32 accumulation so precision matches the kernel's MXU configuration.
# ----------------------------------------------------------------------------
def reference_step(x, hx, embed, eps, params, D):
    bf16, f32 = jnp.bfloat16, jnp.float32
    dot = lambda a, w: jnp.dot(a.astype(bf16), w.astype(bf16),
                               preferred_element_type=f32)
    B = x.shape[0]
    x_flat = jnp.transpose(x, (0, 3, 1, 2)).reshape(B, -1)
    h_enc = jnp.maximum(dot(x_flat, params["w_enc"]) + params["b_enc"], 0.0)
    mu = dot(h_enc, params["w_mu"]) + params["b_mu"]
    sigma = jnp.exp(dot(h_enc, params["w_sig"]) + params["b_sig"])
    eps_b = eps.astype(bf16).astype(f32)    # matches the kernel's bf16 eps input
    out = jnp.concatenate([mu + sigma * eps_b, embed], axis=1)
    H = hx.shape[-1]
    h_out = []
    for d in range(D):
        w_ih, w_hh = params[f"w_ih_{d}"], params[f"w_hh_{d}"]
        b_ih, b_hh = params[f"b_ih_{d}"], params[f"b_hh_{d}"]
        h_prev = hx[d]
        gi = dot(out, w_ih) + b_ih
        gh = dot(h_prev, w_hh) + b_hh
        r = jax.nn.sigmoid(gi[:, :H] + gh[:, :H])
        z = jax.nn.sigmoid(gi[:, H:2 * H] + gh[:, H:2 * H])
        n = jnp.tanh(gi[:, 2 * H:] + r * gh[:, 2 * H:])
        out = (1.0 - z) * n + z * h_prev
        h_out.append(out)
    logits = dot(out, params["w_pi"]) + params["b_pi"]
    value = dot(out, params["w_v"]) + params["b_v"]
    return logits, value, jnp.stack(h_out)


def reference_rollout(x, hx, embed, eps, params, D):
    logits_all, values_all, h = [], [], hx
    for t in range(x.shape[0]):
        lg, vl, h = reference_step(x[t], h, embed[t], eps[t], params, D)
        logits_all.append(lg)
        values_all.append(vl)
    return jnp.stack(logits_all), jnp.stack(values_all), h


# ----------------------------------------------------------------------------
# Deterministic synthetic parameters (PyTorch-equivalent layout, transposed for
# (batch, in) @ (in, out) matmuls; w_enc rows in NCHW-flatten order).
# ----------------------------------------------------------------------------
def _uniform(key, shape, fan_in):
    k = 1.0 / np.sqrt(fan_in)
    return jax.random.uniform(key, shape, jnp.float32, minval=-k, maxval=k)


def init_params(key, *, img_flat, enc_hidden, latent, output_size, lstm_size, D):
    params = {}
    keys = iter(jax.random.split(key, 64))
    params["w_enc"] = _uniform(next(keys), (img_flat, enc_hidden), img_flat)
    params["b_enc"] = _uniform(next(keys), (1, enc_hidden), img_flat)
    params["w_mu"] = _uniform(next(keys), (enc_hidden, latent), enc_hidden)
    params["b_mu"] = _uniform(next(keys), (1, latent), enc_hidden)
    params["w_sig"] = _uniform(next(keys), (enc_hidden, latent), enc_hidden)
    params["b_sig"] = _uniform(next(keys), (1, latent), enc_hidden)
    lstm_input = latent + output_size + 2
    for d in range(D):
        in_d = lstm_input if d == 0 else lstm_size
        params[f"w_ih_{d}"] = _uniform(next(keys), (in_d, 3 * lstm_size), lstm_size)
        params[f"w_hh_{d}"] = _uniform(next(keys), (lstm_size, 3 * lstm_size), lstm_size)
        params[f"b_ih_{d}"] = _uniform(next(keys), (1, 3 * lstm_size), lstm_size)
        params[f"b_hh_{d}"] = _uniform(next(keys), (1, 3 * lstm_size), lstm_size)
    params["w_pi"] = _uniform(next(keys), (lstm_size, output_size), lstm_size)
    params["b_pi"] = _uniform(next(keys), (1, output_size), lstm_size)
    params["w_v"] = _uniform(next(keys), (lstm_size, 1), lstm_size)
    params["b_v"] = _uniform(next(keys), (1, 1), lstm_size)
    return params


if __name__ == "__main__":
    T = 8                       # rollout length (T=1 == original single forward)
    B, Himg, Wimg, C = 2, 16, 16, 4
    output_size = 6
    lstm_size = 128             # nn.GRUCell hidden size (module default 256; small here)
    D = 2
    latent = 32
    enc_hidden = 128
    img_flat = C * Himg * Wimg

    key = jax.random.PRNGKey(0)
    kx, khx, kemb, keps, kparam = jax.random.split(key, 5)

    x = jax.random.normal(kx, (T, B, Himg, Wimg, C), jnp.float32)     # NHWC per step
    hx = jax.random.normal(khx, (D, B, lstm_size), jnp.float32)
    embed = jax.random.normal(kemb, (T, B, output_size + 2), jnp.float32)
    eps = jax.random.normal(keps, (T, B, latent), jnp.float32)        # sample_latent noise

    params = init_params(kparam, img_flat=img_flat, enc_hidden=enc_hidden,
                         latent=latent, output_size=output_size,
                         lstm_size=lstm_size, D=D)
    prepped, bias_off = prepare_params(params, C=C, Hs=Himg, Ws=Wimg, D=D,
                                       lstm_size=lstm_size, latent=latent,
                                       output_size=output_size)

    # --- single-step call (exact original module forward semantics) ----------
    s_logits, s_value, s_h = gru_vae_policy_forward(
        x[0], hx, embed[0], eps[0], prepped, bias_off,
        D=D, lstm_size=lstm_size, latent=latent, output_size=output_size)
    jax.block_until_ready((s_logits, s_value, s_h))
    r_logits, r_value, r_h = reference_step(x[0], hx, embed[0], eps[0], params, D)
    np.testing.assert_allclose(np.asarray(s_logits), np.asarray(r_logits),
                               rtol=2e-2, atol=2e-2)
    np.testing.assert_allclose(np.asarray(s_value), np.asarray(r_value),
                               rtol=2e-2, atol=2e-2)
    np.testing.assert_allclose(np.asarray(s_h), np.asarray(r_h),
                               rtol=2e-2, atol=2e-2)

    # --- T-step in-kernel rollout (weights DMA'd once, state carried in VMEM) -
    logits, value, h_new = gru_vae_policy_rollout(
        x, hx, embed, eps, prepped, bias_off, D=D, lstm_size=lstm_size,
        latent=latent, output_size=output_size)
    jax.block_until_ready((logits, value, h_new))

    ref_logits, ref_value, ref_h = reference_rollout(x, hx, embed, eps, params, D)
    # Slightly looser tolerance: bf16 cast-boundary differences can compound
    # over T recurrent steps.
    np.testing.assert_allclose(np.asarray(logits), np.asarray(ref_logits),
                               rtol=3e-2, atol=3e-2)
    np.testing.assert_allclose(np.asarray(value), np.asarray(ref_value),
                               rtol=3e-2, atol=3e-2)
    np.testing.assert_allclose(np.asarray(h_new), np.asarray(ref_h),
                               rtol=3e-2, atol=3e-2)

    print("KERNEL_OK")
</pallas_src>

<mosaic_0001>
module attributes {stable_mosaic.version = 11 : i64} {
  func.func @_rollout_kernel(%arg0: i32, %arg1: memref<1x8x1024xbf16, #tpu.memory_space<vmem>>, %arg2: memref<1x8x128xbf16, #tpu.memory_space<vmem>>, %arg3: memref<1x8x128xbf16, #tpu.memory_space<vmem>>, %arg4: memref<2x8x128xf32, #tpu.memory_space<vmem>>, %arg5: memref<1024x128xbf16, #tpu.memory_space<vmem>>, %arg6: memref<128x256xbf16, #tpu.memory_space<vmem>>, %arg7: memref<256x384xbf16, #tpu.memory_space<vmem>>, %arg8: memref<1x128x384xbf16, #tpu.memory_space<vmem>>, %arg9: memref<2x128x384xbf16, #tpu.memory_space<vmem>>, %arg10: memref<128x128xbf16, #tpu.memory_space<vmem>>, %arg11: memref<1x2048xf32, #tpu.memory_space<vmem>>, %arg12: memref<1x8x128xf32, #tpu.memory_space<vmem>>, %arg13: memref<2x8x128xf32, #tpu.memory_space<vmem>>) attributes {dimension_semantics = [#tpu.dimension_semantics<arbitrary>], iteration_bounds = array<i64: 1>, scalar_prefetch = 0 : i64, scratch_operands = 0 : i64, tpu.core_type = #tpu.core_type<tc>, window_params = [{transform_indices = @transform_0, window_bounds = array<i64: 1, 8, 1024>}, {transform_indices = @transform_1, window_bounds = array<i64: 1, 8, 128>}, {transform_indices = @transform_2, window_bounds = array<i64: 1, 8, 128>}, {pipeline_mode = #tpu.pipeline_mode<synchronous>, transform_indices = @transform_3, window_bounds = array<i64: 2, 8, 128>}, {pipeline_mode = #tpu.pipeline_mode<synchronous>, transform_indices = @transform_4, window_bounds = array<i64: 1024, 128>}, {pipeline_mode = #tpu.pipeline_mode<synchronous>, transform_indices = @transform_5, window_bounds = array<i64: 128, 256>}, {pipeline_mode = #tpu.pipeline_mode<synchronous>, transform_indices = @transform_6, window_bounds = array<i64: 256, 384>}, {pipeline_mode = #tpu.pipeline_mode<synchronous>, transform_indices = @transform_7, window_bounds = array<i64: 1, 128, 384>}, {pipeline_mode = #tpu.pipeline_mode<synchronous>, transform_indices = @transform_8, window_bounds = array<i64: 2, 128, 384>}, {pipeline_mode = #tpu.pipeline_mode<synchronous>, transform_indices = @transform_9, window_bounds = array<i64: 128, 128>}, {pipeline_mode = #tpu.pipeline_mode<synchronous>, transform_indices = @transform_10, window_bounds = array<i64: 1, 2048>}, {transform_indices = @transform_11, window_bounds = array<i64: 1, 8, 128>}, {pipeline_mode = #tpu.pipeline_mode<synchronous>, transform_indices = @transform_12, window_bounds = array<i64: 2, 8, 128>}]} {
    %c0_i32 = arith.constant 0 : i32
    %0 = arith.cmpi eq, %arg0, %c0_i32 : i32
    %1 = arith.extui %0 : i1 to i32
    %c0_i32_0 = arith.constant 0 : i32
    %2 = arith.cmpi ne, %1, %c0_i32_0 : i32
    scf.if %2 {
      %c0_64 = arith.constant 0 : index
      %c0_65 = arith.constant 0 : index
      %c0_66 = arith.constant 0 : index
      %129 = vector.load %arg4[%c0_64, %c0_65, %c0_66] : memref<2x8x128xf32, #tpu.memory_space<vmem>>, vector<2x8x128xf32>
      %c0_67 = arith.constant 0 : index
      %c0_68 = arith.constant 0 : index
      %c0_69 = arith.constant 0 : index
      %130 = vector.load %arg13[%c0_67, %c0_68, %c0_69] : memref<2x8x128xf32, #tpu.memory_space<vmem>>, vector<2x8x128xf32>
      tpu.vector_store %arg13[%c0_67, %c0_68, %c0_69], %129 {strides = array<i32>} : memref<2x8x128xf32, #tpu.memory_space<vmem>>, vector<2x8x128xf32>,
    } else {
    }
    %c0 = arith.constant 0 : index
    %c0_1 = arith.constant 0 : index
    %c0_2 = arith.constant 0 : index
    %3 = vector.load %arg1[%c0, %c0_1, %c0_2] : memref<1x8x1024xbf16, #tpu.memory_space<vmem>>, vector<1x8x1024xbf16>
    %4 = vector.shape_cast %3 : vector<1x8x1024xbf16> to vector<8x1024xbf16>
    %c0_3 = arith.constant 0 : index
    %c0_4 = arith.constant 0 : index
    %5 = vector.load %arg5[%c0_3, %c0_4] : memref<1024x128xbf16, #tpu.memory_space<vmem>>, vector<1024x128xbf16>
    %cst = arith.constant dense<0.000000e+00> : vector<8x128xf32>
    %6 = tpu.matmul %4, %5, %cst {dimension_numbers = #tpu.dot_dimension_numbers<[1], [0], [0], [1], [0, 0, 1, 1], [], []>} : vector<8x1024xbf16>, vector<1024x128xbf16>, vector<8x128xf32> -> vector<8x128xf32>
    %c0_5 = arith.constant 0 : index
    %c0_6 = arith.constant 0 : index
    %7 = vector.load %arg11[%c0_5, %c0_6] : memref<1x2048xf32, #tpu.memory_space<vmem>>, vector<1x128xf32>
    %8 = vector.broadcast %7 : vector<1x128xf32> to vector<8x128xf32>
    %9 = arith.addf %6, %8 : vector<8x128xf32>
    %cst_7 = arith.constant 0.000000e+00 : f32
    %10 = vector.broadcast %cst_7 : f32 to vector<8x128xf32>
    %11 = arith.maximumf %9, %10 : vector<8x128xf32>
    %12 = arith.truncf %11 : vector<8x128xf32> to vector<8x128xbf16>
    %c0_8 = arith.constant 0 : index
    %c0_9 = arith.constant 0 : index
    %13 = vector.load %arg6[%c0_8, %c0_9] : memref<128x256xbf16, #tpu.memory_space<vmem>>, vector<128x256xbf16>
    %cst_10 = arith.constant dense<0.000000e+00> : vector<8x256xf32>
    %14 = tpu.matmul %12, %13, %cst_10 {dimension_numbers = #tpu.dot_dimension_numbers<[1], [0], [0], [1], [0, 0, 1, 1], [], []>} : vector<8x128xbf16>, vector<128x256xbf16>, vector<8x256xf32> -> vector<8x256xf32>
    %c0_11 = arith.constant 0 : index
    %c128 = arith.constant 128 : index
    %15 = vector.load %arg11[%c0_11, %c128] : memref<1x2048xf32, #tpu.memory_space<vmem>>, vector<1x256xf32>
    %16 = vector.broadcast %15 : vector<1x256xf32> to vector<8x256xf32>
    %17 = arith.addf %14, %16 : vector<8x256xf32>
    %18 = vector.extract_strided_slice %17 {offsets = [0, 0], sizes = [8, 128], strides = [1, 1]} : vector<8x256xf32> to vector<8x128xf32>
    %19 = vector.extract_strided_slice %17 {offsets = [0, 128], sizes = [8, 128], strides = [1, 1]} : vector<8x256xf32> to vector<8x128xf32>
    %20 = math.exp %19 : vector<8x128xf32>
    %c0_12 = arith.constant 0 : index
    %c0_13 = arith.constant 0 : index
    %c0_14 = arith.constant 0 : index
    %21 = vector.load %arg2[%c0_12, %c0_13, %c0_14] : memref<1x8x128xbf16, #tpu.memory_space<vmem>>, vector<1x8x128xbf16>
    %22 = vector.shape_cast %21 : vector<1x8x128xbf16> to vector<8x128xbf16>
    %23 = arith.extf %22 : vector<8x128xbf16> to vector<8x128xf32>
    %24 = arith.mulf %20, %23 : vector<8x128xf32>
    %25 = arith.addf %18, %24 : vector<8x128xf32>
    %c0_15 = arith.constant 0 : index
    %c0_16 = arith.constant 0 : index
    %c0_17 = arith.constant 0 : index
    %26 = vector.load %arg13[%c0_15, %c0_16, %c0_17] : memref<2x8x128xf32, #tpu.memory_space<vmem>>, vector<1x8x128xf32>
    %27 = vector.shape_cast %26 : vector<1x8x128xf32> to vector<8x128xf32>
    %28 = arith.truncf %25 : vector<8x128xf32> to vector<8x128xbf16>
    %c0_18 = arith.constant 0 : index
    %c0_19 = arith.constant 0 : index
    %29 = vector.load %arg7[%c0_18, %c0_19] : memref<256x384xbf16, #tpu.memory_space<vmem>>, vector<128x384xbf16>
    %cst_20 = arith.constant dense<0.000000e+00> : vector<8x384xf32>
    %30 = tpu.matmul %28, %29, %cst_20 {dimension_numbers = #tpu.dot_dimension_numbers<[1], [0], [0], [1], [0, 0, 1, 1], [], []>} : vector<8x128xbf16>, vector<128x384xbf16>, vector<8x384xf32> -> vector<8x384xf32>
    %c0_21 = arith.constant 0 : index
    %c0_22 = arith.constant 0 : index
    %c0_23 = arith.constant 0 : index
    %31 = vector.load %arg3[%c0_21, %c0_22, %c0_23] : memref<1x8x128xbf16, #tpu.memory_space<vmem>>, vector<1x8x128xbf16>
    %32 = vector.shape_cast %31 : vector<1x8x128xbf16> to vector<8x128xbf16>
    %c128_24 = arith.constant 128 : index
    %c0_25 = arith.constant 0 : index
    %33 = vector.load %arg7[%c128_24, %c0_25] : memref<256x384xbf16, #tpu.memory_space<vmem>>, vector<128x384xbf16>
    %cst_26 = arith.constant dense<0.000000e+00> : vector<8x384xf32>
    %34 = tpu.matmul %32, %33, %cst_26 {dimension_numbers = #tpu.dot_dimension_numbers<[1], [0], [0], [1], [0, 0, 1, 1], [], []>} : vector<8x128xbf16>, vector<128x384xbf16>, vector<8x384xf32> -> vector<8x384xf32>
    %35 = arith.addf %30, %34 : vector<8x384xf32>
    %c0_27 = arith.constant 0 : index
    %c384 = arith.constant 384 : index
    %36 = vector.load %arg11[%c0_27, %c384] : memref<1x2048xf32, #tpu.memory_space<vmem>>, vector<1x384xf32>
    %37 = vector.broadcast %36 : vector<1x384xf32> to vector<8x384xf32>
    %38 = arith.addf %35, %37 : vector<8x384xf32>
    %39 = arith.truncf %27 : vector<8x128xf32> to vector<8x128xbf16>
    %c0_28 = arith.constant 0 : index
    %c0_29 = arith.constant 0 : index
    %c0_30 = arith.constant 0 : index
    %40 = vector.load %arg9[%c0_28, %c0_29, %c0_30] : memref<2x128x384xbf16, #tpu.memory_space<vmem>>, vector<1x128x384xbf16>
    %41 = vector.shape_cast %40 : vector<1x128x384xbf16> to vector<128x384xbf16>
    %cst_31 = arith.constant dense<0.000000e+00> : vector<8x384xf32>
    %42 = tpu.matmul %39, %41, %cst_31 {dimension_numbers = #tpu.dot_dimension_numbers<[1], [0], [0], [1], [0, 0, 1, 1], [], []>} : vector<8x128xbf16>, vector<128x384xbf16>, vector<8x384xf32> -> vector<8x384xf32>
    %c0_32 = arith.constant 0 : index
    %c768 = arith.constant 768 : index
    %43 = vector.load %arg11[%c0_32, %c768] : memref<1x2048xf32, #tpu.memory_space<vmem>>, vector<1x384xf32>
    %44 = vector.broadcast %43 : vector<1x384xf32> to vector<8x384xf32>
    %45 = arith.addf %42, %44 : vector<8x384xf32>
    %46 = vector.extract_strided_slice %38 {offsets = [0, 0], sizes = [8, 128], strides = [1, 1]} : vector<8x384xf32> to vector<8x128xf32>
    %47 = vector.extract_strided_slice %45 {offsets = [0, 0], sizes = [8, 128], strides = [1, 1]} : vector<8x384xf32> to vector<8x128xf32>
    %48 = arith.addf %46, %47 : vector<8x128xf32>
    %49 = arith.negf %48 : vector<8x128xf32>
    %50 = math.exp %49 : vector<8x128xf32>
    %cst_33 = arith.constant 1.000000e+00 : f32
    %51 = vector.broadcast %cst_33 : f32 to vector<8x128xf32>
    %52 = arith.addf %51, %50 : vector<8x128xf32>
    %53 = arith.divf %51, %52 : vector<8x128xf32>
    %54 = vector.extract_strided_slice %38 {offsets = [0, 128], sizes = [8, 128], strides = [1, 1]} : vector<8x384xf32> to vector<8x128xf32>
    %55 = vector.extract_strided_slice %45 {offsets = [0, 128], sizes = [8, 128], strides = [1, 1]} : vector<8x384xf32> to vector<8x128xf32>
    %56 = arith.addf %54, %55 : vector<8x128xf32>
    %57 = arith.negf %56 : vector<8x128xf32>
    %58 = math.exp %57 : vector<8x128xf32>
    %cst_34 = arith.constant 1.000000e+00 : f32
    %59 = vector.broadcast %cst_34 : f32 to vector<8x128xf32>
    %60 = arith.addf %59, %58 : vector<8x128xf32>
    %61 = arith.divf %59, %60 : vector<8x128xf32>
    %62 = vector.extract_strided_slice %38 {offsets = [0, 256], sizes = [8, 128], strides = [1, 1]} : vector<8x384xf32> to vector<8x128xf32>
    %63 = vector.extract_strided_slice %45 {offsets = [0, 256], sizes = [8, 128], strides = [1, 1]} : vector<8x384xf32> to vector<8x128xf32>
    %64 = arith.mulf %53, %63 : vector<8x128xf32>
    %65 = arith.addf %62, %64 : vector<8x128xf32>
    %66 = math.tanh %65 : vector<8x128xf32>
    %cst_35 = arith.constant 1.000000e+00 : f32
    %67 = vector.broadcast %cst_35 : f32 to vector<8x128xf32>
    %68 = arith.subf %67, %61 : vector<8x128xf32>
    %69 = arith.mulf %68, %66 : vector<8x128xf32>
    %70 = arith.mulf %61, %27 : vector<8x128xf32>
    %71 = arith.addf %69, %70 : vector<8x128xf32>
    %c0_36 = arith.constant 0 : index
    %c0_37 = arith.constant 0 : index
    %c0_38 = arith.constant 0 : index
    %72 = vector.load %arg13[%c0_36, %c0_37, %c0_38] : memref<2x8x128xf32, #tpu.memory_space<vmem>>, vector<1x8x128xf32>
    %73 = vector.shape_cast %72 : vector<1x8x128xf32> to vector<8x128xf32>
    %74 = vector.shape_cast %71 : vector<8x128xf32> to vector<1x8x128xf32>
    tpu.vector_store %arg13[%c0_36, %c0_37, %c0_38], %74 {strides = array<i32>} : memref<2x8x128xf32, #tpu.memory_space<vmem>>, vector<1x8x128xf32>,
    %75 = arith.truncf %71 : vector<8x128xf32> to vector<8x128xbf16>
    %c1 = arith.constant 1 : index
    %c0_39 = arith.constant 0 : index
    %c0_40 = arith.constant 0 : index
    %76 = vector.load %arg13[%c1, %c0_39, %c0_40] : memref<2x8x128xf32, #tpu.memory_space<vmem>>, vector<1x8x128xf32>
    %77 = vector.shape_cast %76 : vector<1x8x128xf32> to vector<8x128xf32>
    %c0_41 = arith.constant 0 : index
    %c0_42 = arith.constant 0 : index
    %c0_43 = arith.constant 0 : index
    %78 = vector.load %arg8[%c0_41, %c0_42, %c0_43] : memref<1x128x384xbf16, #tpu.memory_space<vmem>>, vector<1x128x384xbf16>
    %79 = vector.shape_cast %78 : vector<1x128x384xbf16> to vector<128x384xbf16>
    %cst_44 = arith.constant dense<0.000000e+00> : vector<8x384xf32>
    %80 = tpu.matmul %75, %79, %cst_44 {dimension_numbers = #tpu.dot_dimension_numbers<[1], [0], [0], [1], [0, 0, 1, 1], [], []>} : vector<8x128xbf16>, vector<128x384xbf16>, vector<8x384xf32> -> vector<8x384xf32>
    %c0_45 = arith.constant 0 : index
    %c1152 = arith.constant 1152 : index
    %81 = vector.load %arg11[%c0_45, %c1152] : memref<1x2048xf32, #tpu.memory_space<vmem>>, vector<1x384xf32>
    %82 = vector.broadcast %81 : vector<1x384xf32> to vector<8x384xf32>
    %83 = arith.addf %80, %82 : vector<8x384xf32>
    %84 = arith.truncf %77 : vector<8x128xf32> to vector<8x128xbf16>
    %c1_46 = arith.constant 1 : index
    %c0_47 = arith.constant 0 : index
    %c0_48 = arith.constant 0 : index
    %85 = vector.load %arg9[%c1_46, %c0_47, %c0_48] : memref<2x128x384xbf16, #tpu.memory_space<vmem>>, vector<1x128x384xbf16>
    %86 = vector.shape_cast %85 : vector<1x128x384xbf16> to vector<128x384xbf16>
    %cst_49 = arith.constant dense<0.000000e+00> : vector<8x384xf32>
    %87 = tpu.matmul %84, %86, %cst_49 {dimension_numbers = #tpu.dot_dimension_numbers<[1], [0], [0], [1], [0, 0, 1, 1], [], []>} : vector<8x128xbf16>, vector<128x384xbf16>, vector<8x384xf32> -> vector<8x384xf32>
    %c0_50 = arith.constant 0 : index
    %c1536 = arith.constant 1536 : index
    %88 = vector.load %arg11[%c0_50, %c1536] : memref<1x2048xf32, #tpu.memory_space<vmem>>, vector<1x384xf32>
    %89 = vector.broadcast %88 : vector<1x384xf32> to vector<8x384xf32>
    %90 = arith.addf %87, %89 : vector<8x384xf32>
    %91 = vector.extract_strided_slice %83 {offsets = [0, 0], sizes = [8, 128], strides = [1, 1]} : vector<8x384xf32> to vector<8x128xf32>
    %92 = vector.extract_strided_slice %90 {offsets = [0, 0], sizes = [8, 128], strides = [1, 1]} : vector<8x384xf32> to vector<8x128xf32>
    %93 = arith.addf %91, %92 : vector<8x128xf32>
    %94 = arith.negf %93 : vector<8x128xf32>
    %95 = math.exp %94 : vector<8x128xf32>
    %cst_51 = arith.constant 1.000000e+00 : f32
    %96 = vector.broadcast %cst_51 : f32 to vector<8x128xf32>
    %97 = arith.addf %96, %95 : vector<8x128xf32>
    %98 = arith.divf %96, %97 : vector<8x128xf32>
    %99 = vector.extract_strided_slice %83 {offsets = [0, 128], sizes = [8, 128], strides = [1, 1]} : vector<8x384xf32> to vector<8x128xf32>
    %100 = vector.extract_strided_slice %90 {offsets = [0, 128], sizes = [8, 128], strides = [1, 1]} : vector<8x384xf32> to vector<8x128xf32>
    %101 = arith.addf %99, %100 : vector<8x128xf32>
    %102 = arith.negf %101 : vector<8x128xf32>
    %103 = math.exp %102 : vector<8x128xf32>
    %cst_52 = arith.constant 1.000000e+00 : f32
    %104 = vector.broadcast %cst_52 : f32 to vector<8x128xf32>
    %105 = arith.addf %104, %103 : vector<8x128xf32>
    %106 = arith.divf %104, %105 : vector<8x128xf32>
    %107 = vector.extract_strided_slice %83 {offsets = [0, 256], sizes = [8, 128], strides = [1, 1]} : vector<8x384xf32> to vector<8x128xf32>
    %108 = vector.extract_strided_slice %90 {offsets = [0, 256], sizes = [8, 128], strides = [1, 1]} : vector<8x384xf32> to vector<8x128xf32>
    %109 = arith.mulf %98, %108 : vector<8x128xf32>
    %110 = arith.addf %107, %109 : vector<8x128xf32>
    %111 = math.tanh %110 : vector<8x128xf32>
    %cst_53 = arith.constant 1.000000e+00 : f32
    %112 = vector.broadcast %cst_53 : f32 to vector<8x128xf32>
    %113 = arith.subf %112, %106 : vector<8x128xf32>
    %114 = arith.mulf %113, %111 : vector<8x128xf32>
    %115 = arith.mulf %106, %77 : vector<8x128xf32>
    %116 = arith.addf %114, %115 : vector<8x128xf32>
    %c1_54 = arith.constant 1 : index
    %c0_55 = arith.constant 0 : index
    %c0_56 = arith.constant 0 : index
    %117 = vector.load %arg13[%c1_54, %c0_55, %c0_56] : memref<2x8x128xf32, #tpu.memory_space<vmem>>, vector<1x8x128xf32>
    %118 = vector.shape_cast %117 : vector<1x8x128xf32> to vector<8x128xf32>
    %119 = vector.shape_cast %116 : vector<8x128xf32> to vector<1x8x128xf32>
    tpu.vector_store %arg13[%c1_54, %c0_55, %c0_56], %119 {strides = array<i32>} : memref<2x8x128xf32, #tpu.memory_space<vmem>>, vector<1x8x128xf32>,
    %120 = arith.truncf %116 : vector<8x128xf32> to vector<8x128xbf16>
    %c0_57 = arith.constant 0 : index
    %c0_58 = arith.constant 0 : index
    %121 = vector.load %arg10[%c0_57, %c0_58] : memref<128x128xbf16, #tpu.memory_space<vmem>>, vector<128x128xbf16>
    %cst_59 = arith.constant dense<0.000000e+00> : vector<8x128xf32>
    %122 = tpu.matmul %120, %121, %cst_59 {dimension_numbers = #tpu.dot_dimension_numbers<[1], [0], [0], [1], [0, 0, 1, 1], [], []>} : vector<8x128xbf16>, vector<128x128xbf16>, vector<8x128xf32> -> vector<8x128xf32>
    %c0_60 = arith.constant 0 : index
    %c1920 = arith.constant 1920 : index
    %123 = vector.load %arg11[%c0_60, %c1920] : memref<1x2048xf32, #tpu.memory_space<vmem>>, vector<1x128xf32>
    %124 = vector.broadcast %123 : vector<1x128xf32> to vector<8x128xf32>
    %125 = arith.addf %122, %124 : vector<8x128xf32>
    %c0_61 = arith.constant 0 : index
    %c0_62 = arith.constant 0 : index
    %c0_63 = arith.constant 0 : index
    %126 = vector.load %arg12[%c0_61, %c0_62, %c0_63] : memref<1x8x128xf32, #tpu.memory_space<vmem>>, vector<1x8x128xf32>
    %127 = vector.shape_cast %126 : vector<1x8x128xf32> to vector<8x128xf32>
    %128 = vector.shape_cast %125 : vector<8x128xf32> to vector<1x8x128xf32>
    tpu.vector_store %arg12[%c0_61, %c0_62, %c0_63], %128 {strides = array<i32>} : memref<1x8x128xf32, #tpu.memory_space<vmem>>, vector<1x8x128xf32>,
    return
  }
  func.func @transform_0(%arg0: i32) -> (i32, i32, i32) {
    %c0_i32 = arith.constant 0 : i32
    %c0_i32_0 = arith.constant 0 : i32
    %c0_i32_1 = arith.constant 0 : i32
    return %arg0, %c0_i32, %c0_i32_0 : i32, i32, i32
  }
  func.func @transform_1(%arg0: i32) -> (i32, i32, i32) {
    %c0_i32 = arith.constant 0 : i32
    %c0_i32_0 = arith.constant 0 : i32
    %c0_i32_1 = arith.constant 0 : i32
    return %arg0, %c0_i32, %c0_i32_0 : i32, i32, i32
  }
  func.func @transform_2(%arg0: i32) -> (i32, i32, i32) {
    %c0_i32 = arith.constant 0 : i32
    %c0_i32_0 = arith.constant 0 : i32
    %c0_i32_1 = arith.constant 0 : i32
    return %arg0, %c0_i32, %c0_i32_0 : i32, i32, i32
  }
  func.func @transform_3(%arg0: i32) -> (i32, i32, i32) {
    %c0_i32 = arith.constant 0 : i32
    %c0_i32_0 = arith.constant 0 : i32
    %c0_i32_1 = arith.constant 0 : i32
    %c0_i32_2 = arith.constant 0 : i32
    return %c0_i32, %c0_i32_0, %c0_i32_1 : i32, i32, i32
  }
  func.func @transform_4(%arg0: i32) -> (i32, i32) {
    %c0_i32 = arith.constant 0 : i32
    %c0_i32_0 = arith.constant 0 : i32
    %c0_i32_1 = arith.constant 0 : i32
    return %c0_i32, %c0_i32_0 : i32, i32
  }
  func.func @transform_5(%arg0: i32) -> (i32, i32) {
    %c0_i32 = arith.constant 0 : i32
    %c0_i32_0 = arith.constant 0 : i32
    %c0_i32_1 = arith.constant 0 : i32
    return %c0_i32, %c0_i32_0 : i32, i32
  }
  func.func @transform_6(%arg0: i32) -> (i32, i32) {
    %c0_i32 = arith.constant 0 : i32
    %c0_i32_0 = arith.constant 0 : i32
    %c0_i32_1 = arith.constant 0 : i32
    return %c0_i32, %c0_i32_0 : i32, i32
  }
  func.func @transform_7(%arg0: i32) -> (i32, i32, i32) {
    %c0_i32 = arith.constant 0 : i32
    %c0_i32_0 = arith.constant 0 : i32
    %c0_i32_1 = arith.constant 0 : i32
    %c0_i32_2 = arith.constant 0 : i32
    return %c0_i32, %c0_i32_0, %c0_i32_1 : i32, i32, i32
  }
  func.func @transform_8(%arg0: i32) -> (i32, i32, i32) {
    %c0_i32 = arith.constant 0 : i32
    %c0_i32_0 = arith.constant 0 : i32
    %c0_i32_1 = arith.constant 0 : i32
    %c0_i32_2 = arith.constant 0 : i32
    return %c0_i32, %c0_i32_0, %c0_i32_1 : i32, i32, i32
  }
  func.func @transform_9(%arg0: i32) -> (i32, i32) {
    %c0_i32 = arith.constant 0 : i32
    %c0_i32_0 = arith.constant 0 : i32
    %c0_i32_1 = arith.constant 0 : i32
    return %c0_i32, %c0_i32_0 : i32, i32
  }
  func.func @transform_10(%arg0: i32) -> (i32, i32) {
    %c0_i32 = arith.constant 0 : i32
    %c0_i32_0 = arith.constant 0 : i32
    %c0_i32_1 = arith.constant 0 : i32
    return %c0_i32, %c0_i32_0 : i32, i32
  }
  func.func @transform_11(%arg0: i32) -> (i32, i32, i32) {
    %c0_i32 = arith.constant 0 : i32
    %c0_i32_0 = arith.constant 0 : i32
    %c0_i32_1 = arith.constant 0 : i32
    return %arg0, %c0_i32, %c0_i32_0 : i32, i32, i32
  }
  func.func @transform_12(%arg0: i32) -> (i32, i32, i32) {
    %c0_i32 = arith.constant 0 : i32
    %c0_i32_0 = arith.constant 0 : i32
    %c0_i32_1 = arith.constant 0 : i32
    %c0_i32_2 = arith.constant 0 : i32
    return %c0_i32, %c0_i32_0, %c0_i32_1 : i32, i32, i32
  }
}

</mosaic_0001>

<llo_original>
// kernel: tpu_custom_call.1
$region0: #{tpu_custom_call.1}
  #allocation0 [shape = 'u32[]', space=smem, size = 0x4, offset = 0x4, fixed_abs, tag = 'smem constant byte address 0x4 - core index']
  #allocation1 [shape = 'u32[144,128]{1,0:T(1,128)}', space=vmem, size = 0x12000, scoped, tag = 'internal scratch']
  %s0 = inlined_call_operand.hbm [shape: bf16[1,8,1024], index: 0, kind: input, shape index: {}]
  %s1 = inlined_call_operand.hbm [shape: bf16[1,8,128], index: 1, kind: input, shape index: {}]
  %s2 = inlined_call_operand.vmem [shape: bf16[1,8,128], index: 2, kind: input, shape index: {}]
  %s3 = inlined_call_operand.hbm [shape: f32[2,8,128], index: 3, kind: input, shape index: {}]
  %s4 = inlined_call_operand.hbm [shape: bf16[1024,128], index: 4, kind: input, shape index: {}]
  %s5 = inlined_call_operand.hbm [shape: bf16[128,256], index: 5, kind: input, shape index: {}]
  %s6 = inlined_call_operand.hbm [shape: bf16[256,384], index: 6, kind: input, shape index: {}]
  %s7 = inlined_call_operand.hbm [shape: bf16[1,128,384], index: 7, kind: input, shape index: {}]
  %s8 = inlined_call_operand.hbm [shape: bf16[2,128,384], index: 8, kind: input, shape index: {}]
  %s9 = inlined_call_operand.hbm [shape: bf16[128,128], index: 9, kind: input, shape index: {}]
  %s10 = inlined_call_operand.vmem [shape: f32[1,2048], index: 10, kind: input, shape index: {}]
  %s11 = inlined_call_operand.hbm [shape: f32[1,8,128], index: 11, kind: output, shape index: {0}]
  %s12 = inlined_call_operand.hbm [shape: f32[2,8,128], index: 12, kind: output, shape index: {1}]
  %13 = xla_tuple %s11, %s12
  %s14 = sld [smem:[#allocation0]]
  $region102: #{tpu_custom_call.1} parent=0
    _
  %s16 = ssub.s32 1, %s14
  %s17 = scalar_select 0, %s16, %s14
  $region1: #{tpu_custom_call.1} parent=0
    #allocation2 [shape = 'u8[16384]{0}', space=vmem, size = 0x4000, scoped, tag = 'input window, operand 0, single buffered']
    #allocation3 [shape = 's32[1]{0}', space=sflag, size = 0x4, scoped, tag = 'scoped memory for tpu_custom_call.1']
    #allocation4 [shape = 's32[1]{0}', space=sflag, size = 0x4, scoped, tag = 'scoped memory for tpu_custom_call.1']
    #allocation5 [shape = 'u8[2048]{0}', space=vmem, size = 0x800, scoped, tag = 'input window, operand 1, single buffered']
    #allocation6 [shape = 's32[1]{0}', space=sflag, size = 0x4, scoped, tag = 'scoped memory for tpu_custom_call.1']
    #allocation7 [shape = 'u8[8192]{0}', space=vmem, size = 0x2000, scoped, tag = 'input window, operand 3, single buffered']
    #allocation8 [shape = 'u8[262144]{0}', space=vmem, size = 0x40000, scoped, tag = 'input window, operand 4, single buffered']
    #allocation9 [shape = 's32[1]{0}', space=sflag, size = 0x4, scoped, tag = 'scoped memory for tpu_custom_call.1']
    #allocation10 [shape = 'u8[65536]{0}', space=vmem, size = 0x10000, scoped, tag = 'input window, operand 5, single buffered']
    #allocation11 [shape = 'u8[196608]{0}', space=vmem, size = 0x30000, scoped, tag = 'input window, operand 6, single buffered']
    #allocation12 [shape = 's32[1]{0}', space=sflag, size = 0x4, scoped, tag = 'scoped memory for tpu_custom_call.1']
    #allocation13 [shape = 'u8[98304]{0}', space=vmem, size = 0x18000, scoped, tag = 'input window, operand 7, single buffered']
    #allocation14 [shape = 'u8[196608]{0}', space=vmem, size = 0x30000, scoped, tag = 'input window, operand 8, single buffered']
    #allocation15 [shape = 's32[1]{0}', space=sflag, size = 0x4, scoped, tag = 'scoped memory for tpu_custom_call.1']
    #allocation16 [shape = 'u8[32768]{0}', space=vmem, size = 0x8000, scoped, tag = 'input window, operand 9, single buffered']
    #allocation17 [shape = 'u8[4096]{0}', space=vmem, size = 0x1000, scoped, tag = 'output window, operand 0, single buffered']
    #allocation18 [shape = 'u8[8192]{0}', space=vmem, size = 0x2000, scoped, tag = 'output window, operand 1, single buffered']
    #allocation19 [shape = 's32[1]{0}', space=sflag, size = 0x4, scoped, tag = 'scoped memory for tpu_custom_call.1']
    %18 = vsyncpa [#allocation3], 0
    %19 = vsyncpa [#allocation6], 0
    %20 = vsyncpa [#allocation9], 0
    %21 = vsyncpa [#allocation12], 0
    %22 = vsyncpa [#allocation15], 0
    %23 = vsyncpa [#allocation4], 0
    %24 = vsyncpa [#allocation19], 0
    // Predicated region
    $region2: #{tpu_custom_call.1} parent=1 // pred_check
      _
    $region3: #{tpu_custom_call.1} parent=1 // pred_check_branch
      %26 = sbr.rel (0) target = $region5
    $region4: #{tpu_custom_call.1} parent=1 // pred_region
      %s28 = ssub.s32 512, 512
      %29 = vsyncadd [#allocation3], %s28
      %s31 = sshll.u32 [#allocation2], 4
      %s32 = int_to_ptr.vmem [resolvable:$true] %s31
      %34 = dma.hbm_to_vmem [thread:$0]  %s0, 512, %s32, [#allocation3]
    $region5: #{tpu_custom_call.1} parent=1 // pred_fallthru
      _
    // Predicated region
    $region6: #{tpu_custom_call.1} parent=1 // pred_check
      _
    $region7: #{tpu_custom_call.1} parent=1 // pred_check_branch
      %36 = sbr.rel (0) target = $region9
    $region8: #{tpu_custom_call.1} parent=1 // pred_region
      %s38 = ssub.s32 64, 64
      %39 = vsyncadd [#allocation6], %s38
      %s41 = sshll.u32 [#allocation5], 4
      %s42 = int_to_ptr.vmem [resolvable:$true] %s41
      %44 = dma.hbm_to_vmem [thread:$0]  %s1, 64, %s42, [#allocation6]
    $region9: #{tpu_custom_call.1} parent=1 // pred_fallthru
      _
    // Predicated region
    $region10: #{tpu_custom_call.1} parent=1 // pred_check
      _
    $region11: #{tpu_custom_call.1} parent=1 // pred_check_branch
      %46 = sbr.rel (0) target = $region13
    $region12: #{tpu_custom_call.1} parent=1 // pred_region
      _
    $region13: #{tpu_custom_call.1} parent=1 // pred_fallthru
      _
    // Predicated region
    $region14: #{tpu_custom_call.1} parent=1 // pred_check
      _
    $region15: #{tpu_custom_call.1} parent=1 // pred_check_branch
      %48 = sbr.rel (0) target = $region17
    $region16: #{tpu_custom_call.1} parent=1 // pred_region
      %s50 = ssub.s32 256, 256
      %51 = vsyncadd [#allocation6], %s50
      %s52 = sshll.u32 [#allocation7], 4
      %s53 = int_to_ptr.vmem [resolvable:$true] %s52
      %58 = dma.hbm_to_vmem [thread:$0]  %s3, 256, %s53, [#allocation6], 128, 128, 8
    $region17: #{tpu_custom_call.1} parent=1 // pred_fallthru
      _
    // Predicated region
    $region18: #{tpu_custom_call.1} parent=1 // pred_check
      _
    $region19: #{tpu_custom_call.1} parent=1 // pred_check_branch
      %60 = sbr.rel (0) target = $region21
    $region20: #{tpu_custom_call.1} parent=1 // pred_region
      %s62 = ssub.s32 8192, 8192
      %63 = vsyncadd [#allocation9], %s62
      %s64 = sshll.u32 [#allocation8], 4
      %s65 = int_to_ptr.vmem [resolvable:$true] %s64
      %70 = dma.hbm_to_vmem [thread:$0]  %s4, 8192, %s65, [#allocation9], 64, 64, 4
    $region21: #{tpu_custom_call.1} parent=1 // pred_fallthru
      _
    // Predicated region
    $region22: #{tpu_custom_call.1} parent=1 // pred_check
      _
    $region23: #{tpu_custom_call.1} parent=1 // pred_check_branch
      %72 = sbr.rel (0) target = $region25
    $region24: #{tpu_custom_call.1} parent=1 // pred_region
      %s74 = ssub.s32 2048, 2048
      %75 = vsyncadd [#allocation9], %s74
      %s76 = sshll.u32 [#allocation10], 4
      %s77 = int_to_ptr.vmem [resolvable:$true] %s76
      %82 = dma.hbm_to_vmem [thread:$0]  %s5, 2048, %s77, [#allocation9], 128, 128, 8
    $region25: #{tpu_custom_call.1} parent=1 // pred_fallthru
      _
    // Predicated region
    $region26: #{tpu_custom_call.1} parent=1 // pred_check
      _
    $region27: #{tpu_custom_call.1} parent=1 // pred_check_branch
      %84 = sbr.rel (0) target = $region29
    $region28: #{tpu_custom_call.1} parent=1 // pred_region
      %s86 = ssub.s32 6144, 6144
      %87 = vsyncadd [#allocation12], %s86
      %s88 = sshll.u32 [#allocation11], 4
      %s89 = int_to_ptr.vmem [resolvable:$true] %s88
      %94 = dma.hbm_to_vmem [thread:$0]  %s6, 6144, %s89, [#allocation12], 192, 192, 12
    $region29: #{tpu_custom_call.1} parent=1 // pred_fallthru
      _
    // Predicated region
    $region30: #{tpu_custom_call.1} parent=1 // pred_check
      _
    $region31: #{tpu_custom_call.1} parent=1 // pred_check_branch
      %96 = sbr.rel (0) target = $region33
    $region32: #{tpu_custom_call.1} parent=1 // pred_region
      %s98 = ssub.s32 3072, 3072
      %99 = vsyncadd [#allocation12], %s98
      %s100 = sshll.u32 [#allocation13], 4
      %s101 = int_to_ptr.vmem [resolvable:$true] %s100
      %106 = dma.hbm_to_vmem [thread:$0]  %s7, 3072, %s101, [#allocation12], 192, 192, 12
    $region33: #{tpu_custom_call.1} parent=1 // pred_fallthru
      _
    // Predicated region
    $region34: #{tpu_custom_call.1} parent=1 // pred_check
      _
    $region35: #{tpu_custom_call.1} parent=1 // pred_check_branch
      %108 = sbr.rel (0) target = $region37
    $region36: #{tpu_custom_call.1} parent=1 // pred_region
      %s110 = ssub.s32 6144, 6144
      %111 = vsyncadd [#allocation15], %s110
      %s112 = sshll.u32 [#allocation14], 4
      %s113 = int_to_ptr.vmem [resolvable:$true] %s112
      %118 = dma.hbm_to_vmem [thread:$0]  %s8, 6144, %s113, [#allocation15], 192, 192, 12
    $region37: #{tpu_custom_call.1} parent=1 // pred_fallthru
      _
    // Predicated region
    $region38: #{tpu_custom_call.1} parent=1 // pred_check
      _
    $region39: #{tpu_custom_call.1} parent=1 // pred_check_branch
      %120 = sbr.rel (0) target = $region41
    $region40: #{tpu_custom_call.1} parent=1 // pred_region
      %s122 = ssub.s32 1024, 1024
      %123 = vsyncadd [#allocation15], %s122
      %s124 = sshll.u32 [#allocation16], 4
      %s125 = int_to_ptr.vmem [resolvable:$true] %s124
      %130 = dma.hbm_to_vmem [thread:$0]  %s9, 1024, %s125, [#allocation15], 64, 64, 4
    $region41: #{tpu_custom_call.1} parent=1 // pred_fallthru
      _
    // Predicated region
    $region42: #{tpu_custom_call.1} parent=1 // pred_check
      _
    $region43: #{tpu_custom_call.1} parent=1 // pred_check_branch
      %132 = sbr.rel (0) target = $region45
    $region44: #{tpu_custom_call.1} parent=1 // pred_region
      _
    $region45: #{tpu_custom_call.1} parent=1 // pred_fallthru
      _
    // Predicated region
    $region46: #{tpu_custom_call.1} parent=1 // pred_check
      _
    $region47: #{tpu_custom_call.1} parent=1 // pred_check_branch
      %134 = sbr.rel (0) target = $region49
    $region48: #{tpu_custom_call.1} parent=1 // pred_region
      %135 = dma.done [#allocation3], 512
    $region49: #{tpu_custom_call.1} parent=1 // pred_fallthru
      _
    // Predicated region
    $region50: #{tpu_custom_call.1} parent=1 // pred_check
      _
    $region51: #{tpu_custom_call.1} parent=1 // pred_check_branch
      %137 = sbr.rel (0) target = $region53
    $region52: #{tpu_custom_call.1} parent=1 // pred_region
      %138 = dma.done [#allocation6], 64
    $region53: #{tpu_custom_call.1} parent=1 // pred_fallthru
      _
    // Predicated region
    $region54: #{tpu_custom_call.1} parent=1 // pred_check
      _
    $region55: #{tpu_custom_call.1} parent=1 // pred_check_branch
      %140 = sbr.rel (0) target = $region57
    $region56: #{tpu_custom_call.1} parent=1 // pred_region
      %141 = dma.done [#allocation6], 256
    $region57: #{tpu_custom_call.1} parent=1 // pred_fallthru
      _
    // Predicated region
    $region58: #{tpu_custom_call.1} parent=1 // pred_check
      _
    $region59: #{tpu_custom_call.1} parent=1 // pred_check_branch
      %143 = sbr.rel (0) target = $region61
    $region60: #{tpu_custom_call.1} parent=1 // pred_region
      %144 = dma.done [#allocation9], 8192
    $region61: #{tpu_custom_call.1} parent=1 // pred_fallthru
      _
    // Predicated region
    $region62: #{tpu_custom_call.1} parent=1 // pred_check
      _
    $region63: #{tpu_custom_call.1} parent=1 // pred_check_branch
      %146 = sbr.rel (0) target = $region65
    $region64: #{tpu_custom_call.1} parent=1 // pred_region
      %147 = dma.done [#allocation9], 2048
    $region65: #{tpu_custom_call.1} parent=1 // pred_fallthru
      _
    // Predicated region
    $region66: #{tpu_custom_call.1} parent=1 // pred_check
      _
    $region67: #{tpu_custom_call.1} parent=1 // pred_check_branch
      %149 = sbr.rel (0) target = $region69
    $region68: #{tpu_custom_call.1} parent=1 // pred_region
      %150 = dma.done [#allocation12], 6144
    $region69: #{tpu_custom_call.1} parent=1 // pred_fallthru
      _
    // Predicated region
    $region70: #{tpu_custom_call.1} parent=1 // pred_check
      _
    $region71: #{tpu_custom_call.1} parent=1 // pred_check_branch
      %152 = sbr.rel (0) target = $region73
    $region72: #{tpu_custom_call.1} parent=1 // pred_region
      %153 = dma.done [#allocation12], 3072
    $region73: #{tpu_custom_call.1} parent=1 // pred_fallthru
      _
    // Predicated region
    $region74: #{tpu_custom_call.1} parent=1 // pred_check
      _
    $region75: #{tpu_custom_call.1} parent=1 // pred_check_branch
      %155 = sbr.rel (0) target = $region77
    $region76: #{tpu_custom_call.1} parent=1 // pred_region
      %156 = dma.done [#allocation15], 6144
    $region77: #{tpu_custom_call.1} parent=1 // pred_fallthru
      _
    // Predicated region
    $region78: #{tpu_custom_call.1} parent=1 // pred_check
      _
    $region79: #{tpu_custom_call.1} parent=1 // pred_check_branch
      %158 = sbr.rel (0) target = $region81
    $region80: #{tpu_custom_call.1} parent=1 // pred_region
      %159 = dma.done [#allocation15], 1024
    $region81: #{tpu_custom_call.1} parent=1 // pred_fallthru
      _
    %p161 = scmp.eq.s32.totalorder 0, 0
    // Predicated region
    $region82: #{tpu_custom_call.1} parent=1 // pred_check
      %p162 = pneg %p161
    $region83: #{tpu_custom_call.1} parent=1 // pred_check_branch
      %164 = sbr.rel (%p162) target = $region85
    $region84: #{tpu_custom_call.1} parent=1 // pred_region
      %v165 = vld [vmem:[#allocation7] sm:$0xff]
      %v166 = vld [vmem:[#allocation7 + $0x8] sm:$0xff]
      %167 = vst [vmem:[#allocation18] sm:$0xff] %v165
      %168 = vst [vmem:[#allocation18 + $0x8] sm:$0xff] %v166
    $region85: #{tpu_custom_call.1} parent=1 // pred_fallthru
      _
    %v169 = vld [vmem:[#allocation2] sm:$0xff]
    %v170 = vld [vmem:[#allocation2 + $0x8] sm:$0xff]
    %v171 = vld [vmem:[#allocation2 + $0x10] sm:$0xff]
    %v172 = vld [vmem:[#allocation2 + $0x18] sm:$0xff]
    %v173 = vld [vmem:[#allocation8] sm:$0xf]
    %v174 = vld [vmem:[#allocation8 + $0x4] sm:$0xf]
    %v175 = vld [vmem:[#allocation8 + $0x8] sm:$0xf]
    %v176 = vld [vmem:[#allocation8 + $0xc] sm:$0xf]
    %v177 = vld [vmem:[#allocation8 + $0x10] sm:$0xf]
    %v178 = vld [vmem:[#allocation8 + $0x14] sm:$0xf]
    %v179 = vld [vmem:[#allocation8 + $0x18] sm:$0xf]
    %v180 = vld [vmem:[#allocation8 + $0x1c] sm:$0xf]
    %v181 = vld [vmem:[#allocation8 + $0x20] sm:$0xf]
    %v182 = vld [vmem:[#allocation8 + $0x24] sm:$0xf]
    %v183 = vld [vmem:[#allocation8 + $0x28] sm:$0xf]
    %v184 = vld [vmem:[#allocation8 + $0x2c] sm:$0xf]
    %v185 = vld [vmem:[#allocation8 + $0x30] sm:$0xf]
    %v186 = vld [vmem:[#allocation8 + $0x34] sm:$0xf]
    %v187 = vld [vmem:[#allocation8 + $0x38] sm:$0xf]
    %v188 = vld [vmem:[#allocation8 + $0x3c] sm:$0xf]
    %v189 = vld [vmem:[#allocation8 + $0x40] sm:$0xf]
    %v190 = vld [vmem:[#allocation8 + $0x44] sm:$0xf]
    %v191 = vld [vmem:[#allocation8 + $0x48] sm:$0xf]
    %v192 = vld [vmem:[#allocation8 + $0x4c] sm:$0xf]
    %v193 = vld [vmem:[#allocation8 + $0x50] sm:$0xf]
    %v194 = vld [vmem:[#allocation8 + $0x54] sm:$0xf]
    %v195 = vld [vmem:[#allocation8 + $0x58] sm:$0xf]
    %v196 = vld [vmem:[#allocation8 + $0x5c] sm:$0xf]
    %v197 = vld [vmem:[#allocation8 + $0x60] sm:$0xf]
    %v198 = vld [vmem:[#allocation8 + $0x64] sm:$0xf]
    %v199 = vld [vmem:[#allocation8 + $0x68] sm:$0xf]
    %v200 = vld [vmem:[#allocation8 + $0x6c] sm:$0xf]
    %v201 = vld [vmem:[#allocation8 + $0x70] sm:$0xf]
    %v202 = vld [vmem:[#allocation8 + $0x74] sm:$0xf]
    %v203 = vld [vmem:[#allocation8 + $0x78] sm:$0xf]
    %v204 = vld [vmem:[#allocation8 + $0x7c] sm:$0xf]
    %v205 = vld [vmem:[#allocation8 + $0x80] sm:$0xf]
    %v206 = vld [vmem:[#allocation8 + $0x84] sm:$0xf]
    %v207 = vld [vmem:[#allocation8 + $0x88] sm:$0xf]
    %v208 = vld [vmem:[#allocation8 + $0x8c] sm:$0xf]
    %v209 = vld [vmem:[#allocation8 + $0x90] sm:$0xf]
    %v210 = vld [vmem:[#allocation8 + $0x94] sm:$0xf]
    %v211 = vld [vmem:[#allocation8 + $0x98] sm:$0xf]
    %v212 = vld [vmem:[#allocation8 + $0x9c] sm:$0xf]
    %v213 = vld [vmem:[#allocation8 + $0xa0] sm:$0xf]
    %v214 = vld [vmem:[#allocation8 + $0xa4] sm:$0xf]
    %v215 = vld [vmem:[#allocation8 + $0xa8] sm:$0xf]
    %v216 = vld [vmem:[#allocation8 + $0xac] sm:$0xf]
    %v217 = vld [vmem:[#allocation8 + $0xb0] sm:$0xf]
    %v218 = vld [vmem:[#allocation8 + $0xb4] sm:$0xf]
    %v219 = vld [vmem:[#allocation8 + $0xb8] sm:$0xf]
    %v220 = vld [vmem:[#allocation8 + $0xbc] sm:$0xf]
    %v221 = vld [vmem:[#allocation8 + $0xc0] sm:$0xf]
    %v222 = vld [vmem:[#allocation8 + $0xc4] sm:$0xf]
    %v223 = vld [vmem:[#allocation8 + $0xc8] sm:$0xf]
    %v224 = vld [vmem:[#allocation8 + $0xcc] sm:$0xf]
    %v225 = vld [vmem:[#allocation8 + $0xd0] sm:$0xf]
    %v226 = vld [vmem:[#allocation8 + $0xd4] sm:$0xf]
    %v227 = vld [vmem:[#allocation8 + $0xd8] sm:$0xf]
    %v228 = vld [vmem:[#allocation8 + $0xdc] sm:$0xf]
    %v229 = vld [vmem:[#allocation8 + $0xe0] sm:$0xf]
    %v230 = vld [vmem:[#allocation8 + $0xe4] sm:$0xf]
    %v231 = vld [vmem:[#allocation8 + $0xe8] sm:$0xf]
    %v232 = vld [vmem:[#allocation8 + $0xec] sm:$0xf]
    %v233 = vld [vmem:[#allocation8 + $0xf0] sm:$0xf]
    %v234 = vld [vmem:[#allocation8 + $0xf4] sm:$0xf]
    %v235 = vld [vmem:[#allocation8 + $0xf8] sm:$0xf]
    %v236 = vld [vmem:[#allocation8 + $0xfc] sm:$0xf]
    %v237 = vld [vmem:[#allocation8 + $0x100] sm:$0xf]
    %v238 = vld [vmem:[#allocation8 + $0x104] sm:$0xf]
    %v239 = vld [vmem:[#allocation8 + $0x108] sm:$0xf]
    %v240 = vld [vmem:[#allocation8 + $0x10c] sm:$0xf]
    %v241 = vld [vmem:[#allocation8 + $0x110] sm:$0xf]
    %v242 = vld [vmem:[#allocation8 + $0x114] sm:$0xf]
    %v243 = vld [vmem:[#allocation8 + $0x118] sm:$0xf]
    %v244 = vld [vmem:[#allocation8 + $0x11c] sm:$0xf]
    %v245 = vld [vmem:[#allocation8 + $0x120] sm:$0xf]
    %v246 = vld [vmem:[#allocation8 + $0x124] sm:$0xf]
    %v247 = vld [vmem:[#allocation8 + $0x128] sm:$0xf]
    %v248 = vld [vmem:[#allocation8 + $0x12c] sm:$0xf]
    %v249 = vld [vmem:[#allocation8 + $0x130] sm:$0xf]
    %v250 = vld [vmem:[#allocation8 + $0x134] sm:$0xf]
    %v251 = vld [vmem:[#allocation8 + $0x138] sm:$0xf]
    %v252 = vld [vmem:[#allocation8 + $0x13c] sm:$0xf]
    %v253 = vld [vmem:[#allocation8 + $0x140] sm:$0xf]
    %v254 = vld [vmem:[#allocation8 + $0x144] sm:$0xf]
    %v255 = vld [vmem:[#allocation8 + $0x148] sm:$0xf]
    %v256 = vld [vmem:[#allocation8 + $0x14c] sm:$0xf]
    %v257 = vld [vmem:[#allocation8 + $0x150] sm:$0xf]
    %v258 = vld [vmem:[#allocation8 + $0x154] sm:$0xf]
    %v259 = vld [vmem:[#allocation8 + $0x158] sm:$0xf]
    %v260 = vld [vmem:[#allocation8 + $0x15c] sm:$0xf]
    %v261 = vld [vmem:[#allocation8 + $0x160] sm:$0xf]
    %v262 = vld [vmem:[#allocation8 + $0x164] sm:$0xf]
    %v263 = vld [vmem:[#allocation8 + $0x168] sm:$0xf]
    %v264 = vld [vmem:[#allocation8 + $0x16c] sm:$0xf]
    %v265 = vld [vmem:[#allocation8 + $0x170] sm:$0xf]
    %v266 = vld [vmem:[#allocation8 + $0x174] sm:$0xf]
    %v267 = vld [vmem:[#allocation8 + $0x178] sm:$0xf]
    %v268 = vld [vmem:[#allocation8 + $0x17c] sm:$0xf]
    %v269 = vld [vmem:[#allocation8 + $0x180] sm:$0xf]
    %v270 = vld [vmem:[#allocation8 + $0x184] sm:$0xf]
    %v271 = vld [vmem:[#allocation8 + $0x188] sm:$0xf]
    %v272 = vld [vmem:[#allocation8 + $0x18c] sm:$0xf]
    %v273 = vld [vmem:[#allocation8 + $0x190] sm:$0xf]
    %v274 = vld [vmem:[#allocation8 + $0x194] sm:$0xf]
    %v275 = vld [vmem:[#allocation8 + $0x198] sm:$0xf]
    %v276 = vld [vmem:[#allocation8 + $0x19c] sm:$0xf]
    %v277 = vld [vmem:[#allocation8 + $0x1a0] sm:$0xf]
    %v278 = vld [vmem:[#allocation8 + $0x1a4] sm:$0xf]
    %v279 = vld [vmem:[#allocation8 + $0x1a8] sm:$0xf]
    %v280 = vld [vmem:[#allocation8 + $0x1ac] sm:$0xf]
    %v281 = vld [vmem:[#allocation8 + $0x1b0] sm:$0xf]
    %v282 = vld [vmem:[#allocation8 + $0x1b4] sm:$0xf]
    %v283 = vld [vmem:[#allocation8 + $0x1b8] sm:$0xf]
    %v284 = vld [vmem:[#allocation8 + $0x1bc] sm:$0xf]
    %v285 = vld [vmem:[#allocation8 + $0x1c0] sm:$0xf]
    %v286 = vld [vmem:[#allocation8 + $0x1c4] sm:$0xf]
    %v287 = vld [vmem:[#allocation8 + $0x1c8] sm:$0xf]
    %v288 = vld [vmem:[#allocation8 + $0x1cc] sm:$0xf]
    %v289 = vld [vmem:[#allocation8 + $0x1d0] sm:$0xf]
    %v290 = vld [vmem:[#allocation8 + $0x1d4] sm:$0xf]
    %v291 = vld [vmem:[#allocation8 + $0x1d8] sm:$0xf]
    %v292 = vld [vmem:[#allocation8 + $0x1dc] sm:$0xf]
    %v293 = vld [vmem:[#allocation8 + $0x1e0] sm:$0xf]
    %v294 = vld [vmem:[#allocation8 + $0x1e4] sm:$0xf]
    %v295 = vld [vmem:[#allocation8 + $0x1e8] sm:$0xf]
    %v296 = vld [vmem:[#allocation8 + $0x1ec] sm:$0xf]
    %v297 = vld [vmem:[#allocation8 + $0x1f0] sm:$0xf]
    %v298 = vld [vmem:[#allocation8 + $0x1f4] sm:$0xf]
    %v299 = vld [vmem:[#allocation8 + $0x1f8] sm:$0xf]
    %v300 = vld [vmem:[#allocation8 + $0x1fc] sm:$0xf]
    %v301 = vld [vmem:[%s10] sm:$0x1]
    %v303 = vlaneseq
    %v304 = vshrl.u32 %v303, 7
    %v305 = vsub.s32 0, %v304
    %v306 = vrot.slane %v301, %v305
    %v312 = vunpack.c.l.b16 %v169
    %v313 = vunpack.c.h.b16 %v169
    %v314 = vunpack.c.l.b16 %v170
    %v315 = vunpack.c.h.b16 %v170
    %v316 = vunpack.c.l.b16 %v171
    %v317 = vunpack.c.h.b16 %v171
    %v318 = vunpack.c.l.b16 %v172
    %v319 = vunpack.c.h.b16 %v172
    %v320 = vpack.c.b16 %v312, %v312
    %v321 = vpack.c.b16 %v313, %v313
    %v322 = vpack.c.b16 %v314, %v314
    %v323 = vpack.c.b16 %v315, %v315
    %v324 = vpack.c.b16 %v316, %v316
    %v325 = vpack.c.b16 %v317, %v317
    %v326 = vpack.c.b16 %v318, %v318
    %v327 = vpack.c.b16 %v319, %v319
    %v464 = vunpack.c.l.b16 %v173
    %v465 = vunpack.c.l.b16 %v174
    %v466 = vunpack.c.l.b16 %v175
    %v467 = vunpack.c.l.b16 %v176
    %v468 = vunpack.c.l.b16 %v177
    %v469 = vunpack.c.l.b16 %v178
    %v470 = vunpack.c.l.b16 %v179
    %v471 = vunpack.c.l.b16 %v180
    %v472 = vunpack.c.l.b16 %v181
    %v473 = vunpack.c.l.b16 %v182
    %v474 = vunpack.c.l.b16 %v183
    %v475 = vunpack.c.l.b16 %v184
    %v476 = vunpack.c.l.b16 %v185
    %v477 = vunpack.c.l.b16 %v186
    %v478 = vunpack.c.l.b16 %v187
    %v479 = vunpack.c.l.b16 %v188
    %v480 = vunpack.c.l.b16 %v189
    %v481 = vunpack.c.l.b16 %v190
    %v482 = vunpack.c.l.b16 %v191
    %v483 = vunpack.c.l.b16 %v192
    %v484 = vunpack.c.l.b16 %v193
    %v485 = vunpack.c.l.b16 %v194
    %v486 = vunpack.c.l.b16 %v195
    %v487 = vunpack.c.l.b16 %v196
    %v488 = vunpack.c.l.b16 %v197
    %v489 = vunpack.c.l.b16 %v198
    %v490 = vunpack.c.l.b16 %v199
    %v491 = vunpack.c.l.b16 %v200
    %v492 = vunpack.c.l.b16 %v201
    %v493 = vunpack.c.l.b16 %v202
    %v494 = vunpack.c.l.b16 %v203
    %v495 = vunpack.c.l.b16 %v204
    %v496 = vunpack.c.l.b16 %v205
    %v497 = vunpack.c.l.b16 %v206
    %v498 = vunpack.c.l.b16 %v207
    %v499 = vunpack.c.l.b16 %v208
    %v500 = vunpack.c.l.b16 %v209
    %v501 = vunpack.c.l.b16 %v210
    %v502 = vunpack.c.l.b16 %v211
    %v503 = vunpack.c.l.b16 %v212
    %v504 = vunpack.c.l.b16 %v213
    %v505 = vunpack.c.l.b16 %v214
    %v506 = vunpack.c.l.b16 %v215
    %v507 = vunpack.c.l.b16 %v216
    %v508 = vunpack.c.l.b16 %v217
    %v509 = vunpack.c.l.b16 %v218
    %v510 = vunpack.c.l.b16 %v219
    %v511 = vunpack.c.l.b16 %v220
    %v512 = vunpack.c.l.b16 %v221
    %v513 = vunpack.c.l.b16 %v222
    %v514 = vunpack.c.l.b16 %v223
    %v515 = vunpack.c.l.b16 %v224
    %v516 = vunpack.c.l.b16 %v225
    %v517 = vunpack.c.l.b16 %v226
    %v518 = vunpack.c.l.b16 %v227
    %v519 = vunpack.c.l.b16 %v228
    %v520 = vunpack.c.l.b16 %v229
    %v521 = vunpack.c.l.b16 %v230
    %v522 = vunpack.c.l.b16 %v231
    %v523 = vunpack.c.l.b16 %v232
    %v524 = vunpack.c.l.b16 %v233
    %v525 = vunpack.c.l.b16 %v234
    %v526 = vunpack.c.l.b16 %v235
    %v527 = vunpack.c.l.b16 %v236
    %v528 = vunpack.c.l.b16 %v237
    %v529 = vunpack.c.l.b16 %v238
    %v530 = vunpack.c.l.b16 %v239
    %v531 = vunpack.c.l.b16 %v240
    %v532 = vunpack.c.l.b16 %v241
    %v533 = vunpack.c.l.b16 %v242
    %v534 = vunpack.c.l.b16 %v243
    %v535 = vunpack.c.l.b16 %v244
    %v536 = vunpack.c.l.b16 %v245
    %v537 = vunpack.c.l.b16 %v246
    %v538 = vunpack.c.l.b16 %v247
    %v539 = vunpack.c.l.b16 %v248
    %v540 = vunpack.c.l.b16 %v249
    %v541 = vunpack.c.l.b16 %v250
    %v542 = vunpack.c.l.b16 %v251
    %v543 = vunpack.c.l.b16 %v252
    %v544 = vunpack.c.l.b16 %v253
    %v545 = vunpack.c.l.b16 %v254
    %v546 = vunpack.c.l.b16 %v255
    %v547 = vunpack.c.l.b16 %v256
    %v548 = vunpack.c.l.b16 %v257
    %v549 = vunpack.c.l.b16 %v258
    %v550 = vunpack.c.l.b16 %v259
    %v551 = vunpack.c.l.b16 %v260
    %v552 = vunpack.c.l.b16 %v261
    %v553 = vunpack.c.l.b16 %v262
    %v554 = vunpack.c.l.b16 %v263
    %v555 = vunpack.c.l.b16 %v264
    %v556 = vunpack.c.l.b16 %v265
    %v557 = vunpack.c.l.b16 %v266
    %v558 = vunpack.c.l.b16 %v267
    %v559 = vunpack.c.l.b16 %v268
    %v560 = vunpack.c.l.b16 %v269
    %v561 = vunpack.c.l.b16 %v270
    %v562 = vunpack.c.l.b16 %v271
    %v563 = vunpack.c.l.b16 %v272
    %v564 = vunpack.c.l.b16 %v273
    %v565 = vunpack.c.l.b16 %v274
    %v566 = vunpack.c.l.b16 %v275
    %v567 = vunpack.c.l.b16 %v276
    %v568 = vunpack.c.l.b16 %v277
    %v569 = vunpack.c.l.b16 %v278
    %v570 = vunpack.c.l.b16 %v279
    %v571 = vunpack.c.l.b16 %v280
    %v572 = vunpack.c.l.b16 %v281
    %v573 = vunpack.c.l.b16 %v282
    %v574 = vunpack.c.l.b16 %v283
    %v575 = vunpack.c.l.b16 %v284
    %v576 = vunpack.c.l.b16 %v285
    %v577 = vunpack.c.l.b16 %v286
    %v578 = vunpack.c.l.b16 %v287
    %v579 = vunpack.c.l.b16 %v288
    %v580 = vunpack.c.l.b16 %v289
    %v581 = vunpack.c.l.b16 %v290
    %v582 = vunpack.c.l.b16 %v291
    %v583 = vunpack.c.l.b16 %v292
    %v584 = vunpack.c.l.b16 %v293
    %v585 = vunpack.c.l.b16 %v294
    %v586 = vunpack.c.l.b16 %v295
    %v587 = vunpack.c.l.b16 %v296
    %v588 = vunpack.c.l.b16 %v297
    %v589 = vunpack.c.l.b16 %v298
    %v590 = vunpack.c.l.b16 %v299
    %v591 = vunpack.c.l.b16 %v300
    %v592 = vpack.c.b16 %v465, %v464
    %v593 = vpack.c.b16 %v467, %v466
    %v594 = vpack.c.b16 %v469, %v468
    %v595 = vpack.c.b16 %v471, %v470
    %v596 = vpack.c.b16 %v473, %v472
    %v597 = vpack.c.b16 %v475, %v474
    %v598 = vpack.c.b16 %v477, %v476
    %v599 = vpack.c.b16 %v479, %v478
    %v600 = vpack.c.b16 %v481, %v480
    %v601 = vpack.c.b16 %v483, %v482
    %v602 = vpack.c.b16 %v485, %v484
    %v603 = vpack.c.b16 %v487, %v486
    %v604 = vpack.c.b16 %v489, %v488
    %v605 = vpack.c.b16 %v491, %v490
    %v606 = vpack.c.b16 %v493, %v492
    %v607 = vpack.c.b16 %v495, %v494
    %v608 = vpack.c.b16 %v497, %v496
    %v609 = vpack.c.b16 %v499, %v498
    %v610 = vpack.c.b16 %v501, %v500
    %v611 = vpack.c.b16 %v503, %v502
    %v612 = vpack.c.b16 %v505, %v504
    %v613 = vpack.c.b16 %v507, %v506
    %v614 = vpack.c.b16 %v509, %v508
    %v615 = vpack.c.b16 %v511, %v510
    %v616 = vpack.c.b16 %v513, %v512
    %v617 = vpack.c.b16 %v515, %v514
    %v618 = vpack.c.b16 %v517, %v516
    %v619 = vpack.c.b16 %v519, %v518
    %v620 = vpack.c.b16 %v521, %v520
    %v621 = vpack.c.b16 %v523, %v522
    %v622 = vpack.c.b16 %v525, %v524
    %v623 = vpack.c.b16 %v527, %v526
    %v624 = vpack.c.b16 %v529, %v528
    %v625 = vpack.c.b16 %v531, %v530
    %v626 = vpack.c.b16 %v533, %v532
    %v627 = vpack.c.b16 %v535, %v534
    %v628 = vpack.c.b16 %v537, %v536
    %v629 = vpack.c.b16 %v539, %v538
    %v630 = vpack.c.b16 %v541, %v540
    %v631 = vpack.c.b16 %v543, %v542
    %v632 = vpack.c.b16 %v545, %v544
    %v633 = vpack.c.b16 %v547, %v546
    %v634 = vpack.c.b16 %v549, %v548
    %v635 = vpack.c.b16 %v551, %v550
    %v636 = vpack.c.b16 %v553, %v552
    %v637 = vpack.c.b16 %v555, %v554
    %v638 = vpack.c.b16 %v557, %v556
    %v639 = vpack.c.b16 %v559, %v558
    %v640 = vpack.c.b16 %v561, %v560
    %v641 = vpack.c.b16 %v563, %v562
    %v642 = vpack.c.b16 %v565, %v564
    %v643 = vpack.c.b16 %v567, %v566
    %v644 = vpack.c.b16 %v569, %v568
    %v645 = vpack.c.b16 %v571, %v570
    %v646 = vpack.c.b16 %v573, %v572
    %v647 = vpack.c.b16 %v575, %v574
    %v648 = vpack.c.b16 %v577, %v576
    %v649 = vpack.c.b16 %v579, %v578
    %v650 = vpack.c.b16 %v581, %v580
    %v651 = vpack.c.b16 %v583, %v582
    %v652 = vpack.c.b16 %v585, %v584
    %v653 = vpack.c.b16 %v587, %v586
    %v654 = vpack.c.b16 %v589, %v588
    %v655 = vpack.c.b16 %v591, %v590
    %720 = vmatprep.subr.bf16.mxu0 0
    %721 = vmatpush1.bf16.msra.mxu0 %v592
    %722 = vmatprep.subr.bf16.mxu0 0
    %723 = vmatpush1.bf16.msra.mxu0 %v593
    %724 = vmatprep.subr.bf16.mxu0 0
    %725 = vmatpush1.bf16.msra.mxu0 %v594
    %726 = vmatprep.subr.bf16.mxu0 0
    %727 = vmatpush1.bf16.msra.mxu0 %v595
    %728 = vmatprep.subr.bf16.mxu0 0
    %729 = vmatpush1.bf16.msra.mxu0 %v596
    %730 = vmatprep.subr.bf16.mxu0 0
    %731 = vmatpush1.bf16.msra.mxu0 %v597
    %732 = vmatprep.subr.bf16.mxu0 0
    %733 = vmatpush1.bf16.msra.mxu0 %v598
    %734 = vmatprep.subr.bf16.mxu0 0
    %735 = vmatpush1.bf16.msra.mxu0 %v599
    %736 = vmatprep.subr.bf16.mxu0 0
    %737 = vmatpush1.bf16.msra.mxu0 %v600
    %738 = vmatprep.subr.bf16.mxu0 0
    %739 = vmatpush1.bf16.msra.mxu0 %v601
    %740 = vmatprep.subr.bf16.mxu0 0
    %741 = vmatpush1.bf16.msra.mxu0 %v602
    %742 = vmatprep.subr.bf16.mxu0 0
    %743 = vmatpush1.bf16.msra.mxu0 %v603
    %744 = vmatprep.subr.bf16.mxu0 0
    %745 = vmatpush1.bf16.msra.mxu0 %v604
    %746 = vmatprep.subr.bf16.mxu0 0
    %747 = vmatpush1.bf16.msra.mxu0 %v605
    %748 = vmatprep.subr.bf16.mxu0 0
    %749 = vmatpush1.bf16.msra.mxu0 %v606
    %750 = vmatprep.subr.bf16.mxu0 0
    %751 = vmatpush1.bf16.msra.mxu0 %v607
    %752 = vmatprep.mubr.bf16.mxu0 %v321
    %753 = vmatmul.mubr.bf16.gmra.mrb[0].mxu0 %v320
    %v754 = vpop.f32.mrb[0].mxu0
    %v755 = vadd.f32 %v306, %v754
    %v756 = vpop.f32.mrb[0].mxu0
    %v757 = vpop.f32.mrb[0].mxu0
    %v758 = vpop.f32.mrb[0].mxu0
    %759 = vdwg.mxu0
    %760 = vmatprep.subr.bf16.mxu0 0
    %761 = vmatpush1.bf16.msra.mxu0 %v608
    %762 = vmatprep.subr.bf16.mxu0 0
    %763 = vmatpush1.bf16.msra.mxu0 %v609
    %764 = vmatprep.subr.bf16.mxu0 0
    %765 = vmatpush1.bf16.msra.mxu0 %v610
    %766 = vmatprep.subr.bf16.mxu0 0
    %767 = vmatpush1.bf16.msra.mxu0 %v611
    %768 = vmatprep.subr.bf16.mxu0 0
    %769 = vmatpush1.bf16.msra.mxu0 %v612
    %770 = vmatprep.subr.bf16.mxu0 0
    %771 = vmatpush1.bf16.msra.mxu0 %v613
    %772 = vmatprep.subr.bf16.mxu0 0
    %773 = vmatpush1.bf16.msra.mxu0 %v614
    %774 = vmatprep.subr.bf16.mxu0 0
    %775 = vmatpush1.bf16.msra.mxu0 %v615
    %776 = vmatprep.subr.bf16.mxu0 0
    %777 = vmatpush1.bf16.msra.mxu0 %v616
    %778 = vmatprep.subr.bf16.mxu0 0
    %779 = vmatpush1.bf16.msra.mxu0 %v617
    %780 = vmatprep.subr.bf16.mxu0 0
    %781 = vmatpush1.bf16.msra.mxu0 %v618
    %782 = vmatprep.subr.bf16.mxu0 0
    %783 = vmatpush1.bf16.msra.mxu0 %v619
    %784 = vmatprep.subr.bf16.mxu0 0
    %785 = vmatpush1.bf16.msra.mxu0 %v620
    %786 = vmatprep.subr.bf16.mxu0 0
    %787 = vmatpush1.bf16.msra.mxu0 %v621
    %788 = vmatprep.subr.bf16.mxu0 0
    %789 = vmatpush1.bf16.msra.mxu0 %v622
    %790 = vmatprep.subr.bf16.mxu0 0
    %791 = vmatpush1.bf16.msra.mxu0 %v623
    %792 = vmatprep.mubr.bf16.mxu0 %v323
    %793 = vmatmul.mubr.bf16.gmra.mrb[0].mxu0 %v322
    %v794 = vpop.f32.mrb[0].mxu0
    %v795 = vadd.f32 %v755, %v794
    %v796 = vpop.f32.mrb[0].mxu0
    %v797 = vpop.f32.mrb[0].mxu0
    %v798 = vpop.f32.mrb[0].mxu0
    %799 = vdwg.mxu0
    %800 = vmatprep.subr.bf16.mxu0 0
    %801 = vmatpush1.bf16.msra.mxu0 %v624
    %802 = vmatprep.subr.bf16.mxu0 0
    %803 = vmatpush1.bf16.msra.mxu0 %v625
    %804 = vmatprep.subr.bf16.mxu0 0
    %805 = vmatpush1.bf16.msra.mxu0 %v626
    %806 = vmatprep.subr.bf16.mxu0 0
    %807 = vmatpush1.bf16.msra.mxu0 %v627
    %808 = vmatprep.subr.bf16.mxu0 0
    %809 = vmatpush1.bf16.msra.mxu0 %v628
    %810 = vmatprep.subr.bf16.mxu0 0
    %811 = vmatpush1.bf16.msra.mxu0 %v629
    %812 = vmatprep.subr.bf16.mxu0 0
    %813 = vmatpush1.bf16.msra.mxu0 %v630
    %814 = vmatprep.subr.bf16.mxu0 0
    %815 = vmatpush1.bf16.msra.mxu0 %v631
    %816 = vmatprep.subr.bf16.mxu0 0
    %817 = vmatpush1.bf16.msra.mxu0 %v632
    %818 = vmatprep.subr.bf16.mxu0 0
    %819 = vmatpush1.bf16.msra.mxu0 %v633
    %820 = vmatprep.subr.bf16.mxu0 0
    %821 = vmatpush1.bf16.msra.mxu0 %v634
    %822 = vmatprep.subr.bf16.mxu0 0
    %823 = vmatpush1.bf16.msra.mxu0 %v635
    %824 = vmatprep.subr.bf16.mxu0 0
    %825 = vmatpush1.bf16.msra.mxu0 %v636
    %826 = vmatprep.subr.bf16.mxu0 0
    %827 = vmatpush1.bf16.msra.mxu0 %v637
    %828 = vmatprep.subr.bf16.mxu0 0
    %829 = vmatpush1.bf16.msra.mxu0 %v638
    %830 = vmatprep.subr.bf16.mxu0 0
    %831 = vmatpush1.bf16.msra.mxu0 %v639
    %832 = vmatprep.mubr.bf16.mxu0 %v325
    %833 = vmatmul.mubr.bf16.gmra.mrb[0].mxu0 %v324
    %v834 = vpop.f32.mrb[0].mxu0
    %v835 = vadd.f32 %v795, %v834
    %v836 = vpop.f32.mrb[0].mxu0
    %v837 = vpop.f32.mrb[0].mxu0
    %v838 = vpop.f32.mrb[0].mxu0
    %839 = vdwg.mxu0
    %840 = vmatprep.subr.bf16.mxu0 0
    %841 = vmatpush1.bf16.msra.mxu0 %v640
    %842 = vmatprep.subr.bf16.mxu0 0
    %843 = vmatpush1.bf16.msra.mxu0 %v641
    %844 = vmatprep.subr.bf16.mxu0 0
    %845 = vmatpush1.bf16.msra.mxu0 %v642
    %846 = vmatprep.subr.bf16.mxu0 0
    %847 = vmatpush1.bf16.msra.mxu0 %v643
    %848 = vmatprep.subr.bf16.mxu0 0
    %849 = vmatpush1.bf16.msra.mxu0 %v644
    %850 = vmatprep.subr.bf16.mxu0 0
    %851 = vmatpush1.bf16.msra.mxu0 %v645
    %852 = vmatprep.subr.bf16.mxu0 0
    %853 = vmatpush1.bf16.msra.mxu0 %v646
    %854 = vmatprep.subr.bf16.mxu0 0
    %855 = vmatpush1.bf16.msra.mxu0 %v647
    %856 = vmatprep.subr.bf16.mxu0 0
    %857 = vmatpush1.bf16.msra.mxu0 %v648
    %858 = vmatprep.subr.bf16.mxu0 0
    %859 = vmatpush1.bf16.msra.mxu0 %v649
    %860 = vmatprep.subr.bf16.mxu0 0
    %861 = vmatpush1.bf16.msra.mxu0 %v650
    %862 = vmatprep.subr.bf16.mxu0 0
    %863 = vmatpush1.bf16.msra.mxu0 %v651
    %864 = vmatprep.subr.bf16.mxu0 0
    %865 = vmatpush1.bf16.msra.mxu0 %v652
    %866 = vmatprep.subr.bf16.mxu0 0
    %867 = vmatpush1.bf16.msra.mxu0 %v653
    %868 = vmatprep.subr.bf16.mxu0 0
    %869 = vmatpush1.bf16.msra.mxu0 %v654
    %870 = vmatprep.subr.bf16.mxu0 0
    %871 = vmatpush1.bf16.msra.mxu0 %v655
    %872 = vmatprep.mubr.bf16.mxu0 %v327
    %873 = vmatmul.mubr.bf16.gmra.mrb[0].mxu0 %v326
    %v874 = vpop.f32.mrb[0].mxu0
    %v875 = vadd.f32 %v835, %v874
    %v876 = vpop.f32.mrb[0].mxu0
    %v877 = vpop.f32.mrb[0].mxu0
    %v878 = vpop.f32.mrb[0].mxu0
    %879 = vdwg.mxu0
    %v880 = vmax.f32 %v875, 0.0
    %v881 = vpack.c.bf16 %v880, %v880
    %v882 = vld [vmem:[#allocation10] sm:$0xff]
    %v883 = vld [vmem:[#allocation10 + $0x8] sm:$0xff]
    %v884 = vld [vmem:[#allocation10 + $0x10] sm:$0xff]
    %v885 = vld [vmem:[#allocation10 + $0x18] sm:$0xff]
    %v886 = vld [vmem:[#allocation10 + $0x20] sm:$0xff]
    %v887 = vld [vmem:[#allocation10 + $0x28] sm:$0xff]
    %v888 = vld [vmem:[#allocation10 + $0x30] sm:$0xff]
    %v889 = vld [vmem:[#allocation10 + $0x38] sm:$0xff]
    %v890 = vld [vmem:[#allocation10 + $0x40] sm:$0xff]
    %v891 = vld [vmem:[#allocation10 + $0x48] sm:$0xff]
    %v892 = vld [vmem:[#allocation10 + $0x50] sm:$0xff]
    %v893 = vld [vmem:[#allocation10 + $0x58] sm:$0xff]
    %v894 = vld [vmem:[#allocation10 + $0x60] sm:$0xff]
    %v895 = vld [vmem:[#allocation10 + $0x68] sm:$0xff]
    %v896 = vld [vmem:[#allocation10 + $0x70] sm:$0xff]
    %v897 = vld [vmem:[#allocation10 + $0x78] sm:$0xff]
    %v898 = vld [vmem:[%s10 + $0x1] sm:$0x3]
    %v900 = vlaneseq
    %v901 = vshrl.u32 %v900, 7
    %v902 = vsub.s32 0, %v901
    %v903 = vrot.slane %v898, %v902
    %v904 = vlaneseq
    %v905 = vshrl.u32 %v904, 7
    %v906 = vsub.s32 1, %v905
    %v907 = vrot.slane %v898, %v906
    %v926 = vunpack.c.l.b16 %v882
    %v927 = vunpack.c.h.b16 %v882
    %v928 = vunpack.c.l.b16 %v883
    %v929 = vunpack.c.h.b16 %v883
    %v930 = vunpack.c.l.b16 %v884
    %v931 = vunpack.c.h.b16 %v884
    %v932 = vunpack.c.l.b16 %v885
    %v933 = vunpack.c.h.b16 %v885
    %v934 = vunpack.c.l.b16 %v886
    %v935 = vunpack.c.h.b16 %v886
    %v936 = vunpack.c.l.b16 %v887
    %v937 = vunpack.c.h.b16 %v887
    %v938 = vunpack.c.l.b16 %v888
    %v939 = vunpack.c.h.b16 %v888
    %v940 = vunpack.c.l.b16 %v889
    %v941 = vunpack.c.h.b16 %v889
    %v942 = vunpack.c.l.b16 %v890
    %v943 = vunpack.c.h.b16 %v890
    %v944 = vunpack.c.l.b16 %v891
    %v945 = vunpack.c.h.b16 %v891
    %v946 = vunpack.c.l.b16 %v892
    %v947 = vunpack.c.h.b16 %v892
    %v948 = vunpack.c.l.b16 %v893
    %v949 = vunpack.c.h.b16 %v893
    %v950 = vunpack.c.l.b16 %v894
    %v951 = vunpack.c.h.b16 %v894
    %v952 = vunpack.c.l.b16 %v895
    %v953 = vunpack.c.h.b16 %v895
    %v954 = vunpack.c.l.b16 %v896
    %v955 = vunpack.c.h.b16 %v896
    %v956 = vunpack.c.l.b16 %v897
    %v957 = vunpack.c.h.b16 %v897
    %v958 = vpack.c.b16 %v928, %v926
    %v959 = vpack.c.b16 %v929, %v927
    %v960 = vpack.c.b16 %v932, %v930
    %v961 = vpack.c.b16 %v933, %v931
    %v962 = vpack.c.b16 %v936, %v934
    %v963 = vpack.c.b16 %v937, %v935
    %v964 = vpack.c.b16 %v940, %v938
    %v965 = vpack.c.b16 %v941, %v939
    %v966 = vpack.c.b16 %v944, %v942
    %v967 = vpack.c.b16 %v945, %v943
    %v968 = vpack.c.b16 %v948, %v946
    %v969 = vpack.c.b16 %v949, %v947
    %v970 = vpack.c.b16 %v952, %v950
    %v971 = vpack.c.b16 %v953, %v951
    %v972 = vpack.c.b16 %v956, %v954
    %v973 = vpack.c.b16 %v957, %v955
    %990 = vmatprep.subr.bf16.mxu0 %v959
    %991 = vmatpush1.bf16.msra.mxu0 %v958
    %992 = vmatprep.subr.bf16.mxu0 %v961
    %993 = vmatpush1.bf16.msra.mxu0 %v960
    %994 = vmatprep.subr.bf16.mxu0 %v963
    %995 = vmatpush1.bf16.msra.mxu0 %v962
    %996 = vmatprep.subr.bf16.mxu0 %v965
    %997 = vmatpush1.bf16.msra.mxu0 %v964
    %998 = vmatprep.subr.bf16.mxu0 %v967
    %999 = vmatpush1.bf16.msra.mxu0 %v966
    %1000 = vmatprep.subr.bf16.mxu0 %v969
    %1001 = vmatpush1.bf16.msra.mxu0 %v968
    %1002 = vmatprep.subr.bf16.mxu0 %v971
    %1003 = vmatpush1.bf16.msra.mxu0 %v970
    %1004 = vmatprep.subr.bf16.mxu0 %v973
    %1005 = vmatpush1.bf16.msra.mxu0 %v972
    %1006 = vmatprep.subr.bf16.mxu0 0
    %1007 = vmatpush1.bf16.msra.mxu0 0
    %1008 = vmatprep.subr.bf16.mxu0 0
    %1009 = vmatpush1.bf16.msra.mxu0 0
    %1010 = vmatprep.subr.bf16.mxu0 0
    %1011 = vmatpush1.bf16.msra.mxu0 0
    %1012 = vmatprep.subr.bf16.mxu0 0
    %1013 = vmatpush1.bf16.msra.mxu0 0
    %1014 = vmatprep.subr.bf16.mxu0 0
    %1015 = vmatpush1.bf16.msra.mxu0 0
    %1016 = vmatprep.subr.bf16.mxu0 0
    %1017 = vmatpush1.bf16.msra.mxu0 0
    %1018 = vmatprep.subr.bf16.mxu0 0
    %1019 = vmatpush1.bf16.msra.mxu0 0
    %1020 = vmatprep.subr.bf16.mxu0 0
    %1021 = vmatpush1.bf16.msra.mxu0 0
    %1022 = vmatprep.mubr.bf16.mxu0 0
    %1023 = vmatmul.mubr.bf16.gmra.mrb[0].mxu0 %v881
    %v1024 = vpop.f32.mrb[0].mxu0
    %v1025 = vadd.f32 %v903, %v1024
    %v1026 = vpop.f32.mrb[0].mxu0
    %v1027 = vadd.f32 %v907, %v1026
    %v1028 = vpop.f32.mrb[0].mxu0
    %v1029 = vpop.f32.mrb[0].mxu0
    %1030 = vdwg.mxu0
    %v1031 = vmul.f32 %v1027, 1.442695
    %v1032 = vpow.pop %v1031
    %v1033 = vld [vmem:[#allocation5] sm:$0xf]
    %v1034 = vunpack.c.l.bf16 %v1033
    %v1035 = vmul.f32 %v1032, %v1034
    %v1036 = vadd.f32 %v1025, %v1035
    %v1037 = vld [vmem:[#allocation18] sm:$0xff]
    %v1038 = vpack.c.bf16 %v1036, %v1036
    %v1039 = vld [vmem:[#allocation11] sm:$0xff]
    %v1040 = vld [vmem:[#allocation11 + $0x8] sm:$0xf]
    %v1041 = vld [vmem:[#allocation11 + $0xc] sm:$0xff]
    %v1042 = vld [vmem:[#allocation11 + $0x14] sm:$0xf]
    %v1043 = vld [vmem:[#allocation11 + $0x18] sm:$0xff]
    %v1044 = vld [vmem:[#allocation11 + $0x20] sm:$0xf]
    %v1045 = vld [vmem:[#allocation11 + $0x24] sm:$0xff]
    %v1046 = vld [vmem:[#allocation11 + $0x2c] sm:$0xf]
    %v1047 = vld [vmem:[#allocation11 + $0x30] sm:$0xff]
    %v1048 = vld [vmem:[#allocation11 + $0x38] sm:$0xf]
    %v1049 = vld [vmem:[#allocation11 + $0x3c] sm:$0xff]
    %v1050 = vld [vmem:[#allocation11 + $0x44] sm:$0xf]
    %v1051 = vld [vmem:[#allocation11 + $0x48] sm:$0xff]
    %v1052 = vld [vmem:[#allocation11 + $0x50] sm:$0xf]
    %v1053 = vld [vmem:[#allocation11 + $0x54] sm:$0xff]
    %v1054 = vld [vmem:[#allocation11 + $0x5c] sm:$0xf]
    %v1055 = vld [vmem:[#allocation11 + $0x60] sm:$0xff]
    %v1056 = vld [vmem:[#allocation11 + $0x68] sm:$0xf]
    %v1057 = vld [vmem:[#allocation11 + $0x6c] sm:$0xff]
    %v1058 = vld [vmem:[#allocation11 + $0x74] sm:$0xf]
    %v1059 = vld [vmem:[#allocation11 + $0x78] sm:$0xff]
    %v1060 = vld [vmem:[#allocation11 + $0x80] sm:$0xf]
    %v1061 = vld [vmem:[#allocation11 + $0x84] sm:$0xff]
    %v1062 = vld [vmem:[#allocation11 + $0x8c] sm:$0xf]
    %v1063 = vld [vmem:[#allocation11 + $0x90] sm:$0xff]
    %v1064 = vld [vmem:[#allocation11 + $0x98] sm:$0xf]
    %v1065 = vld [vmem:[#allocation11 + $0x9c] sm:$0xff]
    %v1066 = vld [vmem:[#allocation11 + $0xa4] sm:$0xf]
    %v1067 = vld [vmem:[#allocation11 + $0xa8] sm:$0xff]
    %v1068 = vld [vmem:[#allocation11 + $0xb0] sm:$0xf]
    %v1069 = vld [vmem:[#allocation11 + $0xb4] sm:$0xff]
    %v1070 = vld [vmem:[#allocation11 + $0xbc] sm:$0xf]
    %v1071 = vld [vmem:[%s2] sm:$0xf]
    %v1072 = vld [vmem:[#allocation11 + $0xc0] sm:$0xff]
    %v1073 = vld [vmem:[#allocation11 + $0xc8] sm:$0xf]
    %v1074 = vld [vmem:[#allocation11 + $0xcc] sm:$0xff]
    %v1075 = vld [vmem:[#allocation11 + $0xd4] sm:$0xf]
    %v1076 = vld [vmem:[#allocation11 + $0xd8] sm:$0xff]
    %v1077 = vld [vmem:[#allocation11 + $0xe0] sm:$0xf]
    %v1078 = vld [vmem:[#allocation11 + $0xe4] sm:$0xff]
    %v1079 = vld [vmem:[#allocation11 + $0xec] sm:$0xf]
    %v1080 = vld [vmem:[#allocation11 + $0xf0] sm:$0xff]
    %v1081 = vld [vmem:[#allocation11 + $0xf8] sm:$0xf]
    %v1082 = vld [vmem:[#allocation11 + $0xfc] sm:$0xff]
    %v1083 = vld [vmem:[#allocation11 + $0x104] sm:$0xf]
    %v1084 = vld [vmem:[#allocation11 + $0x108] sm:$0xff]
    %v1085 = vld [vmem:[#allocation11 + $0x110] sm:$0xf]
    %v1086 = vld [vmem:[#allocation11 + $0x114] sm:$0xff]
    %v1087 = vld [vmem:[#allocation11 + $0x11c] sm:$0xf]
    %v1088 = vld [vmem:[#allocation11 + $0x120] sm:$0xff]
    %v1089 = vld [vmem:[#allocation11 + $0x128] sm:$0xf]
    %v1090 = vld [vmem:[#allocation11 + $0x12c] sm:$0xff]
    %v1091 = vld [vmem:[#allocation11 + $0x134] sm:$0xf]
    %v1092 = vld [vmem:[#allocation11 + $0x138] sm:$0xff]
    %v1093 = vld [vmem:[#allocation11 + $0x140] sm:$0xf]
    %v1094 = vld [vmem:[#allocation11 + $0x144] sm:$0xff]
    %v1095 = vld [vmem:[#allocation11 + $0x14c] sm:$0xf]
    %v1096 = vld [vmem:[#allocation11 + $0x150] sm:$0xff]
    %v1097 = vld [vmem:[#allocation11 + $0x158] sm:$0xf]
    %v1098 = vld [vmem:[#allocation11 + $0x15c] sm:$0xff]
    %v1099 = vld [vmem:[#allocation11 + $0x164] sm:$0xf]
    %v1100 = vld [vmem:[#allocation11 + $0x168] sm:$0xff]
    %v1101 = vld [vmem:[#allocation11 + $0x170] sm:$0xf]
    %v1102 = vld [vmem:[#allocation11 + $0x174] sm:$0xff]
    %v1103 = vld [vmem:[#allocation11 + $0x17c] sm:$0xf]
    %v1136 = vunpack.c.l.b16 %v1072
    %v1137 = vunpack.c.h.b16 %v1072
    %v1138 = vunpack.c.l.b16 %v1073
    %v1139 = vunpack.c.l.b16 %v1074
    %v1140 = vunpack.c.h.b16 %v1074
    %v1141 = vunpack.c.l.b16 %v1075
    %v1142 = vunpack.c.l.b16 %v1076
    %v1143 = vunpack.c.h.b16 %v1076
    %v1144 = vunpack.c.l.b16 %v1077
    %v1145 = vunpack.c.l.b16 %v1078
    %v1146 = vunpack.c.h.b16 %v1078
    %v1147 = vunpack.c.l.b16 %v1079
    %v1148 = vunpack.c.l.b16 %v1080
    %v1149 = vunpack.c.h.b16 %v1080
    %v1150 = vunpack.c.l.b16 %v1081
    %v1151 = vunpack.c.l.b16 %v1082
    %v1152 = vunpack.c.h.b16 %v1082
    %v1153 = vunpack.c.l.b16 %v1083
    %v1154 = vunpack.c.l.b16 %v1084
    %v1155 = vunpack.c.h.b16 %v1084
    %v1156 = vunpack.c.l.b16 %v1085
    %v1157 = vunpack.c.l.b16 %v1086
    %v1158 = vunpack.c.h.b16 %v1086
    %v1159 = vunpack.c.l.b16 %v1087
    %v1160 = vunpack.c.l.b16 %v1088
    %v1161 = vunpack.c.h.b16 %v1088
    %v1162 = vunpack.c.l.b16 %v1089
    %v1163 = vunpack.c.l.b16 %v1090
    %v1164 = vunpack.c.h.b16 %v1090
    %v1165 = vunpack.c.l.b16 %v1091
    %v1166 = vunpack.c.l.b16 %v1092
    %v1167 = vunpack.c.h.b16 %v1092
    %v1168 = vunpack.c.l.b16 %v1093
    %v1169 = vunpack.c.l.b16 %v1094
    %v1170 = vunpack.c.h.b16 %v1094
    %v1171 = vunpack.c.l.b16 %v1095
    %v1172 = vunpack.c.l.b16 %v1096
    %v1173 = vunpack.c.h.b16 %v1096
    %v1174 = vunpack.c.l.b16 %v1097
    %v1175 = vunpack.c.l.b16 %v1098
    %v1176 = vunpack.c.h.b16 %v1098
    %v1177 = vunpack.c.l.b16 %v1099
    %v1178 = vunpack.c.l.b16 %v1100
    %v1179 = vunpack.c.h.b16 %v1100
    %v1180 = vunpack.c.l.b16 %v1101
    %v1181 = vunpack.c.l.b16 %v1102
    %v1182 = vunpack.c.h.b16 %v1102
    %v1183 = vunpack.c.l.b16 %v1103
    %v1184 = vpack.c.b16 %v1139, %v1136
    %v1185 = vpack.c.b16 %v1140, %v1137
    %v1186 = vpack.c.b16 %v1141, %v1138
    %v1187 = vpack.c.b16 %v1145, %v1142
    %v1188 = vpack.c.b16 %v1146, %v1143
    %v1189 = vpack.c.b16 %v1147, %v1144
    %v1190 = vpack.c.b16 %v1151, %v1148
    %v1191 = vpack.c.b16 %v1152, %v1149
    %v1192 = vpack.c.b16 %v1153, %v1150
    %v1193 = vpack.c.b16 %v1157, %v1154
    %v1194 = vpack.c.b16 %v1158, %v1155
    %v1195 = vpack.c.b16 %v1159, %v1156
    %v1196 = vpack.c.b16 %v1163, %v1160
    %v1197 = vpack.c.b16 %v1164, %v1161
    %v1198 = vpack.c.b16 %v1165, %v1162
    %v1199 = vpack.c.b16 %v1169, %v1166
    %v1200 = vpack.c.b16 %v1170, %v1167
    %v1201 = vpack.c.b16 %v1171, %v1168
    %v1202 = vpack.c.b16 %v1175, %v1172
    %v1203 = vpack.c.b16 %v1176, %v1173
    %v1204 = vpack.c.b16 %v1177, %v1174
    %v1205 = vpack.c.b16 %v1181, %v1178
    %v1206 = vpack.c.b16 %v1182, %v1179
    %v1207 = vpack.c.b16 %v1183, %v1180
    %1232 = vmatprep.subr.bf16.mxu0 %v1185
    %1233 = vmatpush1.bf16.msra.mxu0 %v1184
    %1234 = vmatprep.subr.bf16.mxu0 %v1188
    %1235 = vmatpush1.bf16.msra.mxu0 %v1187
    %1236 = vmatprep.subr.bf16.mxu0 %v1191
    %1237 = vmatpush1.bf16.msra.mxu0 %v1190
    %1238 = vmatprep.subr.bf16.mxu0 %v1194
    %1239 = vmatpush1.bf16.msra.mxu0 %v1193
    %1240 = vmatprep.subr.bf16.mxu0 %v1197
    %1241 = vmatpush1.bf16.msra.mxu0 %v1196
    %1242 = vmatprep.subr.bf16.mxu0 %v1200
    %1243 = vmatpush1.bf16.msra.mxu0 %v1199
    %1244 = vmatprep.subr.bf16.mxu0 %v1203
    %1245 = vmatpush1.bf16.msra.mxu0 %v1202
    %1246 = vmatprep.subr.bf16.mxu0 %v1206
    %1247 = vmatpush1.bf16.msra.mxu0 %v1205
    %1248 = vmatprep.subr.bf16.mxu0 0
    %1249 = vmatpush1.bf16.msra.mxu0 0
    %1250 = vmatprep.subr.bf16.mxu0 0
    %1251 = vmatpush1.bf16.msra.mxu0 0
    %1252 = vmatprep.subr.bf16.mxu0 0
    %1253 = vmatpush1.bf16.msra.mxu0 0
    %1254 = vmatprep.subr.bf16.mxu0 0
    %1255 = vmatpush1.bf16.msra.mxu0 0
    %1256 = vmatprep.subr.bf16.mxu0 0
    %1257 = vmatpush1.bf16.msra.mxu0 0
    %1258 = vmatprep.subr.bf16.mxu0 0
    %1259 = vmatpush1.bf16.msra.mxu0 0
    %1260 = vmatprep.subr.bf16.mxu0 0
    %1261 = vmatpush1.bf16.msra.mxu0 0
    %1262 = vmatprep.subr.bf16.mxu0 0
    %1263 = vmatpush1.bf16.msra.mxu0 0
    %1264 = vmatprep.mubr.bf16.mxu0 0
    %1265 = vmatmul.mubr.bf16.gmra.mrb[0].mxu0 %v1071
    %v1266 = vpop.f32.mrb[0].mxu0
    %v1267 = vadd.f32 0.0, %v1266
    %v1268 = vpop.f32.mrb[0].mxu0
    %v1269 = vadd.f32 0.0, %v1268
    %v1270 = vpop.f32.mrb[0].mxu0
    %v1271 = vpop.f32.mrb[0].mxu0
    %1272 = vdwg.mxu0
    %1273 = vmatprep.subr.bf16.mxu0 0
    %1274 = vmatpush1.bf16.msra.mxu0 %v1186
    %1275 = vmatprep.subr.bf16.mxu0 0
    %1276 = vmatpush1.bf16.msra.mxu0 %v1189
    %1277 = vmatprep.subr.bf16.mxu0 0
    %1278 = vmatpush1.bf16.msra.mxu0 %v1192
    %1279 = vmatprep.subr.bf16.mxu0 0
    %1280 = vmatpush1.bf16.msra.mxu0 %v1195
    %1281 = vmatprep.subr.bf16.mxu0 0
    %1282 = vmatpush1.bf16.msra.mxu0 %v1198
    %1283 = vmatprep.subr.bf16.mxu0 0
    %1284 = vmatpush1.bf16.msra.mxu0 %v1201
    %1285 = vmatprep.subr.bf16.mxu0 0
    %1286 = vmatpush1.bf16.msra.mxu0 %v1204
    %1287 = vmatprep.subr.bf16.mxu0 0
    %1288 = vmatpush1.bf16.msra.mxu0 %v1207
    %1289 = vmatprep.subr.bf16.mxu0 0
    %1290 = vmatpush1.bf16.msra.mxu0 0
    %1291 = vmatprep.subr.bf16.mxu0 0
    %1292 = vmatpush1.bf16.msra.mxu0 0
    %1293 = vmatprep.subr.bf16.mxu0 0
    %1294 = vmatpush1.bf16.msra.mxu0 0
    %1295 = vmatprep.subr.bf16.mxu0 0
    %1296 = vmatpush1.bf16.msra.mxu0 0
    %1297 = vmatprep.subr.bf16.mxu0 0
    %1298 = vmatpush1.bf16.msra.mxu0 0
    %1299 = vmatprep.subr.bf16.mxu0 0
    %1300 = vmatpush1.bf16.msra.mxu0 0
    %1301 = vmatprep.subr.bf16.mxu0 0
    %1302 = vmatpush1.bf16.msra.mxu0 0
    %1303 = vmatprep.subr.bf16.mxu0 0
    %1304 = vmatpush1.bf16.msra.mxu0 0
    %1305 = vmatprep.mubr.bf16.mxu0 0
    %1306 = vmatmul.mubr.bf16.gmra.mrb[0].mxu0 %v1071
    %v1307 = vpop.f32.mrb[0].mxu0
    %v1308 = vadd.f32 0.0, %v1307
    %v1309 = vpop.f32.mrb[0].mxu0
    %v1310 = vpop.f32.mrb[0].mxu0
    %v1311 = vpop.f32.mrb[0].mxu0
    %1312 = vdwg.mxu0
    %v1345 = vunpack.c.l.b16 %v1039
    %v1346 = vunpack.c.h.b16 %v1039
    %v1347 = vunpack.c.l.b16 %v1040
    %v1348 = vunpack.c.l.b16 %v1041
    %v1349 = vunpack.c.h.b16 %v1041
    %v1350 = vunpack.c.l.b16 %v1042
    %v1351 = vunpack.c.l.b16 %v1043
    %v1352 = vunpack.c.h.b16 %v1043
    %v1353 = vunpack.c.l.b16 %v1044
    %v1354 = vunpack.c.l.b16 %v1045
    %v1355 = vunpack.c.h.b16 %v1045
    %v1356 = vunpack.c.l.b16 %v1046
    %v1357 = vunpack.c.l.b16 %v1047
    %v1358 = vunpack.c.h.b16 %v1047
    %v1359 = vunpack.c.l.b16 %v1048
    %v1360 = vunpack.c.l.b16 %v1049
    %v1361 = vunpack.c.h.b16 %v1049
    %v1362 = vunpack.c.l.b16 %v1050
    %v1363 = vunpack.c.l.b16 %v1051
    %v1364 = vunpack.c.h.b16 %v1051
    %v1365 = vunpack.c.l.b16 %v1052
    %v1366 = vunpack.c.l.b16 %v1053
    %v1367 = vunpack.c.h.b16 %v1053
    %v1368 = vunpack.c.l.b16 %v1054
    %v1369 = vunpack.c.l.b16 %v1055
    %v1370 = vunpack.c.h.b16 %v1055
    %v1371 = vunpack.c.l.b16 %v1056
    %v1372 = vunpack.c.l.b16 %v1057
    %v1373 = vunpack.c.h.b16 %v1057
    %v1374 = vunpack.c.l.b16 %v1058
    %v1375 = vunpack.c.l.b16 %v1059
    %v1376 = vunpack.c.h.b16 %v1059
    %v1377 = vunpack.c.l.b16 %v1060
    %v1378 = vunpack.c.l.b16 %v1061
    %v1379 = vunpack.c.h.b16 %v1061
    %v1380 = vunpack.c.l.b16 %v1062
    %v1381 = vunpack.c.l.b16 %v1063
    %v1382 = vunpack.c.h.b16 %v1063
    %v1383 = vunpack.c.l.b16 %v1064
    %v1384 = vunpack.c.l.b16 %v1065
    %v1385 = vunpack.c.h.b16 %v1065
    %v1386 = vunpack.c.l.b16 %v1066
    %v1387 = vunpack.c.l.b16 %v1067
    %v1388 = vunpack.c.h.b16 %v1067
    %v1389 = vunpack.c.l.b16 %v1068
    %v1390 = vunpack.c.l.b16 %v1069
    %v1391 = vunpack.c.h.b16 %v1069
    %v1392 = vunpack.c.l.b16 %v1070
    %v1393 = vpack.c.b16 %v1348, %v1345
    %v1394 = vpack.c.b16 %v1349, %v1346
    %v1395 = vpack.c.b16 %v1350, %v1347
    %v1396 = vpack.c.b16 %v1354, %v1351
    %v1397 = vpack.c.b16 %v1355, %v1352
    %v1398 = vpack.c.b16 %v1356, %v1353
    %v1399 = vpack.c.b16 %v1360, %v1357
    %v1400 = vpack.c.b16 %v1361, %v1358
    %v1401 = vpack.c.b16 %v1362, %v1359
    %v1402 = vpack.c.b16 %v1366, %v1363
    %v1403 = vpack.c.b16 %v1367, %v1364
    %v1404 = vpack.c.b16 %v1368, %v1365
    %v1405 = vpack.c.b16 %v1372, %v1369
    %v1406 = vpack.c.b16 %v1373, %v1370
    %v1407 = vpack.c.b16 %v1374, %v1371
    %v1408 = vpack.c.b16 %v1378, %v1375
    %v1409 = vpack.c.b16 %v1379, %v1376
    %v1410 = vpack.c.b16 %v1380, %v1377
    %v1411 = vpack.c.b16 %v1384, %v1381
    %v1412 = vpack.c.b16 %v1385, %v1382
    %v1413 = vpack.c.b16 %v1386, %v1383
    %v1414 = vpack.c.b16 %v1390, %v1387
    %v1415 = vpack.c.b16 %v1391, %v1388
    %v1416 = vpack.c.b16 %v1392, %v1389
    %1441 = vmatprep.subr.bf16.mxu0 %v1394
    %1442 = vmatpush1.bf16.msra.mxu0 %v1393
    %1443 = vmatprep.subr.bf16.mxu0 %v1397
    %1444 = vmatpush1.bf16.msra.mxu0 %v1396
    %1445 = vmatprep.subr.bf16.mxu0 %v1400
    %1446 = vmatpush1.bf16.msra.mxu0 %v1399
    %1447 = vmatprep.subr.bf16.mxu0 %v1403
    %1448 = vmatpush1.bf16.msra.mxu0 %v1402
    %1449 = vmatprep.subr.bf16.mxu0 %v1406
    %1450 = vmatpush1.bf16.msra.mxu0 %v1405
    %1451 = vmatprep.subr.bf16.mxu0 %v1409
    %1452 = vmatpush1.bf16.msra.mxu0 %v1408
    %1453 = vmatprep.subr.bf16.mxu0 %v1412
    %1454 = vmatpush1.bf16.msra.mxu0 %v1411
    %1455 = vmatprep.subr.bf16.mxu0 %v1415
    %1456 = vmatpush1.bf16.msra.mxu0 %v1414
    %1457 = vmatprep.subr.bf16.mxu0 0
    %1458 = vmatpush1.bf16.msra.mxu0 0
    %1459 = vmatprep.subr.bf16.mxu0 0
    %1460 = vmatpush1.bf16.msra.mxu0 0
    %1461 = vmatprep.subr.bf16.mxu0 0
    %1462 = vmatpush1.bf16.msra.mxu0 0
    %1463 = vmatprep.subr.bf16.mxu0 0
    %1464 = vmatpush1.bf16.msra.mxu0 0
    %1465 = vmatprep.subr.bf16.mxu0 0
    %1466 = vmatpush1.bf16.msra.mxu0 0
    %1467 = vmatprep.subr.bf16.mxu0 0
    %1468 = vmatpush1.bf16.msra.mxu0 0
    %1469 = vmatprep.subr.bf16.mxu0 0
    %1470 = vmatpush1.bf16.msra.mxu0 0
    %1471 = vmatprep.subr.bf16.mxu0 0
    %1472 = vmatpush1.bf16.msra.mxu0 0
    %1473 = vmatprep.mubr.bf16.mxu0 0
    %1474 = vmatmul.mubr.bf16.gmra.mrb[0].mxu0 %v1038
    %v1475 = vpop.f32.mrb[0].mxu0
    %v1476 = vadd.f32 %v1267, %v1475
    %v1477 = vpop.f32.mrb[0].mxu0
    %v1478 = vadd.f32 %v1269, %v1477
    %v1479 = vpop.f32.mrb[0].mxu0
    %v1480 = vpop.f32.mrb[0].mxu0
    %1481 = vdwg.mxu0
    %1482 = vmatprep.subr.bf16.mxu0 0
    %1483 = vmatpush1.bf16.msra.mxu0 %v1395
    %1484 = vmatprep.subr.bf16.mxu0 0
    %1485 = vmatpush1.bf16.msra.mxu0 %v1398
    %1486 = vmatprep.subr.bf16.mxu0 0
    %1487 = vmatpush1.bf16.msra.mxu0 %v1401
    %1488 = vmatprep.subr.bf16.mxu0 0
    %1489 = vmatpush1.bf16.msra.mxu0 %v1404
    %1490 = vmatprep.subr.bf16.mxu0 0
    %1491 = vmatpush1.bf16.msra.mxu0 %v1407
    %1492 = vmatprep.subr.bf16.mxu0 0
    %1493 = vmatpush1.bf16.msra.mxu0 %v1410
    %1494 = vmatprep.subr.bf16.mxu0 0
    %1495 = vmatpush1.bf16.msra.mxu0 %v1413
    %1496 = vmatprep.subr.bf16.mxu0 0
    %1497 = vmatpush1.bf16.msra.mxu0 %v1416
    %1498 = vmatprep.subr.bf16.mxu0 0
    %1499 = vmatpush1.bf16.msra.mxu0 0
    %1500 = vmatprep.subr.bf16.mxu0 0
    %1501 = vmatpush1.bf16.msra.mxu0 0
    %1502 = vmatprep.subr.bf16.mxu0 0
    %1503 = vmatpush1.bf16.msra.mxu0 0
    %1504 = vmatprep.subr.bf16.mxu0 0
    %1505 = vmatpush1.bf16.msra.mxu0 0
    %1506 = vmatprep.subr.bf16.mxu0 0
    %1507 = vmatpush1.bf16.msra.mxu0 0
    %1508 = vmatprep.subr.bf16.mxu0 0
    %1509 = vmatpush1.bf16.msra.mxu0 0
    %1510 = vmatprep.subr.bf16.mxu0 0
    %1511 = vmatpush1.bf16.msra.mxu0 0
    %1512 = vmatprep.subr.bf16.mxu0 0
    %1513 = vmatpush1.bf16.msra.mxu0 0
    %1514 = vmatprep.mubr.bf16.mxu0 0
    %1515 = vmatmul.mubr.bf16.gmra.mrb[0].mxu0 %v1038
    %v1516 = vpop.f32.mrb[0].mxu0
    %v1517 = vadd.f32 %v1308, %v1516
    %v1518 = vpop.f32.mrb[0].mxu0
    %v1519 = vpop.f32.mrb[0].mxu0
    %v1520 = vpop.f32.mrb[0].mxu0
    %1521 = vdwg.mxu0
    %v1522 = vld [vmem:[%s10 + $0x3] sm:$0x7]
    %v1524 = vlaneseq
    %v1525 = vshrl.u32 %v1524, 7
    %v1526 = vsub.s32 0, %v1525
    %v1527 = vrot.slane %v1522, %v1526
    %v1528 = vlaneseq
    %v1529 = vshrl.u32 %v1528, 7
    %v1530 = vsub.s32 1, %v1529
    %v1531 = vrot.slane %v1522, %v1530
    %v1532 = vlaneseq
    %v1533 = vshrl.u32 %v1532, 7
    %v1534 = vsub.s32 2, %v1533
    %v1535 = vrot.slane %v1522, %v1534
    %v1539 = vadd.f32 %v1476, %v1527
    %v1540 = vadd.f32 %v1478, %v1531
    %v1541 = vadd.f32 %v1517, %v1535
    %v1542 = vpack.c.bf16 %v1037, %v1037
    %v1543 = vld [vmem:[#allocation14] sm:$0xff]
    %v1544 = vld [vmem:[#allocation14 + $0x8] sm:$0xf]
    %v1545 = vld [vmem:[#allocation14 + $0xc] sm:$0xff]
    %v1546 = vld [vmem:[#allocation14 + $0x14] sm:$0xf]
    %v1547 = vld [vmem:[#allocation14 + $0x18] sm:$0xff]
    %v1548 = vld [vmem:[#allocation14 + $0x20] sm:$0xf]
    %v1549 = vld [vmem:[#allocation14 + $0x24] sm:$0xff]
    %v1550 = vld [vmem:[#allocation14 + $0x2c] sm:$0xf]
    %v1551 = vld [vmem:[#allocation14 + $0x30] sm:$0xff]
    %v1552 = vld [vmem:[#allocation14 + $0x38] sm:$0xf]
    %v1553 = vld [vmem:[#allocation14 + $0x3c] sm:$0xff]
    %v1554 = vld [vmem:[#allocation14 + $0x44] sm:$0xf]
    %v1555 = vld [vmem:[#allocation14 + $0x48] sm:$0xff]
    %v1556 = vld [vmem:[#allocation14 + $0x50] sm:$0xf]
    %v1557 = vld [vmem:[#allocation14 + $0x54] sm:$0xff]
    %v1558 = vld [vmem:[#allocation14 + $0x5c] sm:$0xf]
    %v1559 = vld [vmem:[#allocation14 + $0x60] sm:$0xff]
    %v1560 = vld [vmem:[#allocation14 + $0x68] sm:$0xf]
    %v1561 = vld [vmem:[#allocation14 + $0x6c] sm:$0xff]
    %v1562 = vld [vmem:[#allocation14 + $0x74] sm:$0xf]
    %v1563 = vld [vmem:[#allocation14 + $0x78] sm:$0xff]
    %v1564 = vld [vmem:[#allocation14 + $0x80] sm:$0xf]
    %v1565 = vld [vmem:[#allocation14 + $0x84] sm:$0xff]
    %v1566 = vld [vmem:[#allocation14 + $0x8c] sm:$0xf]
    %v1567 = vld [vmem:[#allocation14 + $0x90] sm:$0xff]
    %v1568 = vld [vmem:[#allocation14 + $0x98] sm:$0xf]
    %v1569 = vld [vmem:[#allocation14 + $0x9c] sm:$0xff]
    %v1570 = vld [vmem:[#allocation14 + $0xa4] sm:$0xf]
    %v1571 = vld [vmem:[#allocation14 + $0xa8] sm:$0xff]
    %v1572 = vld [vmem:[#allocation14 + $0xb0] sm:$0xf]
    %v1573 = vld [vmem:[#allocation14 + $0xb4] sm:$0xff]
    %v1574 = vld [vmem:[#allocation14 + $0xbc] sm:$0xf]
    %v1575 = vld [vmem:[%s10 + $0x6] sm:$0x7]
    %v1577 = vlaneseq
    %v1578 = vshrl.u32 %v1577, 7
    %v1579 = vsub.s32 0, %v1578
    %v1580 = vrot.slane %v1575, %v1579
    %v1581 = vlaneseq
    %v1582 = vshrl.u32 %v1581, 7
    %v1583 = vsub.s32 1, %v1582
    %v1584 = vrot.slane %v1575, %v1583
    %v1585 = vlaneseq
    %v1586 = vshrl.u32 %v1585, 7
    %v1587 = vsub.s32 2, %v1586
    %v1588 = vrot.slane %v1575, %v1587
    %v1624 = vunpack.c.l.b16 %v1543
    %v1625 = vunpack.c.h.b16 %v1543
    %v1626 = vunpack.c.l.b16 %v1544
    %v1627 = vunpack.c.l.b16 %v1545
    %v1628 = vunpack.c.h.b16 %v1545
    %v1629 = vunpack.c.l.b16 %v1546
    %v1630 = vunpack.c.l.b16 %v1547
    %v1631 = vunpack.c.h.b16 %v1547
    %v1632 = vunpack.c.l.b16 %v1548
    %v1633 = vunpack.c.l.b16 %v1549
    %v1634 = vunpack.c.h.b16 %v1549
    %v1635 = vunpack.c.l.b16 %v1550
    %v1636 = vunpack.c.l.b16 %v1551
    %v1637 = vunpack.c.h.b16 %v1551
    %v1638 = vunpack.c.l.b16 %v1552
    %v1639 = vunpack.c.l.b16 %v1553
    %v1640 = vunpack.c.h.b16 %v1553
    %v1641 = vunpack.c.l.b16 %v1554
    %v1642 = vunpack.c.l.b16 %v1555
    %v1643 = vunpack.c.h.b16 %v1555
    %v1644 = vunpack.c.l.b16 %v1556
    %v1645 = vunpack.c.l.b16 %v1557
    %v1646 = vunpack.c.h.b16 %v1557
    %v1647 = vunpack.c.l.b16 %v1558
    %v1648 = vunpack.c.l.b16 %v1559
    %v1649 = vunpack.c.h.b16 %v1559
    %v1650 = vunpack.c.l.b16 %v1560
    %v1651 = vunpack.c.l.b16 %v1561
    %v1652 = vunpack.c.h.b16 %v1561
    %v1653 = vunpack.c.l.b16 %v1562
    %v1654 = vunpack.c.l.b16 %v1563
    %v1655 = vunpack.c.h.b16 %v1563
    %v1656 = vunpack.c.l.b16 %v1564
    %v1657 = vunpack.c.l.b16 %v1565
    %v1658 = vunpack.c.h.b16 %v1565
    %v1659 = vunpack.c.l.b16 %v1566
    %v1660 = vunpack.c.l.b16 %v1567
    %v1661 = vunpack.c.h.b16 %v1567
    %v1662 = vunpack.c.l.b16 %v1568
    %v1663 = vunpack.c.l.b16 %v1569
    %v1664 = vunpack.c.h.b16 %v1569
    %v1665 = vunpack.c.l.b16 %v1570
    %v1666 = vunpack.c.l.b16 %v1571
    %v1667 = vunpack.c.h.b16 %v1571
    %v1668 = vunpack.c.l.b16 %v1572
    %v1669 = vunpack.c.l.b16 %v1573
    %v1670 = vunpack.c.h.b16 %v1573
    %v1671 = vunpack.c.l.b16 %v1574
    %v1672 = vpack.c.b16 %v1627, %v1624
    %v1673 = vpack.c.b16 %v1628, %v1625
    %v1674 = vpack.c.b16 %v1629, %v1626
    %v1675 = vpack.c.b16 %v1633, %v1630
    %v1676 = vpack.c.b16 %v1634, %v1631
    %v1677 = vpack.c.b16 %v1635, %v1632
    %v1678 = vpack.c.b16 %v1639, %v1636
    %v1679 = vpack.c.b16 %v1640, %v1637
    %v1680 = vpack.c.b16 %v1641, %v1638
    %v1681 = vpack.c.b16 %v1645, %v1642
    %v1682 = vpack.c.b16 %v1646, %v1643
    %v1683 = vpack.c.b16 %v1647, %v1644
    %v1684 = vpack.c.b16 %v1651, %v1648
    %v1685 = vpack.c.b16 %v1652, %v1649
    %v1686 = vpack.c.b16 %v1653, %v1650
    %v1687 = vpack.c.b16 %v1657, %v1654
    %v1688 = vpack.c.b16 %v1658, %v1655
    %v1689 = vpack.c.b16 %v1659, %v1656
    %v1690 = vpack.c.b16 %v1663, %v1660
    %v1691 = vpack.c.b16 %v1664, %v1661
    %v1692 = vpack.c.b16 %v1665, %v1662
    %v1693 = vpack.c.b16 %v1669, %v1666
    %v1694 = vpack.c.b16 %v1670, %v1667
    %v1695 = vpack.c.b16 %v1671, %v1668
    %1720 = vmatprep.subr.bf16.mxu0 %v1673
    %1721 = vmatpush1.bf16.msra.mxu0 %v1672
    %1722 = vmatprep.subr.bf16.mxu0 %v1676
    %1723 = vmatpush1.bf16.msra.mxu0 %v1675
    %1724 = vmatprep.subr.bf16.mxu0 %v1679
    %1725 = vmatpush1.bf16.msra.mxu0 %v1678
    %1726 = vmatprep.subr.bf16.mxu0 %v1682
    %1727 = vmatpush1.bf16.msra.mxu0 %v1681
    %1728 = vmatprep.subr.bf16.mxu0 %v1685
    %1729 = vmatpush1.bf16.msra.mxu0 %v1684
    %1730 = vmatprep.subr.bf16.mxu0 %v1688
    %1731 = vmatpush1.bf16.msra.mxu0 %v1687
    %1732 = vmatprep.subr.bf16.mxu0 %v1691
    %1733 = vmatpush1.bf16.msra.mxu0 %v1690
    %1734 = vmatprep.subr.bf16.mxu0 %v1694
    %1735 = vmatpush1.bf16.msra.mxu0 %v1693
    %1736 = vmatprep.subr.bf16.mxu0 0
    %1737 = vmatpush1.bf16.msra.mxu0 0
    %1738 = vmatprep.subr.bf16.mxu0 0
    %1739 = vmatpush1.bf16.msra.mxu0 0
    %1740 = vmatprep.subr.bf16.mxu0 0
    %1741 = vmatpush1.bf16.msra.mxu0 0
    %1742 = vmatprep.subr.bf16.mxu0 0
    %1743 = vmatpush1.bf16.msra.mxu0 0
    %1744 = vmatprep.subr.bf16.mxu0 0
    %1745 = vmatpush1.bf16.msra.mxu0 0
    %1746 = vmatprep.subr.bf16.mxu0 0
    %1747 = vmatpush1.bf16.msra.mxu0 0
    %1748 = vmatprep.subr.bf16.mxu0 0
    %1749 = vmatpush1.bf16.msra.mxu0 0
    %1750 = vmatprep.subr.bf16.mxu0 0
    %1751 = vmatpush1.bf16.msra.mxu0 0
    %1752 = vmatprep.mubr.bf16.mxu0 0
    %1753 = vmatmul.mubr.bf16.gmra.mrb[0].mxu0 %v1542
    %v1754 = vpop.f32.mrb[0].mxu0
    %v1755 = vadd.f32 %v1580, %v1754
    %v1756 = vpop.f32.mrb[0].mxu0
    %v1757 = vadd.f32 %v1584, %v1756
    %v1758 = vpop.f32.mrb[0].mxu0
    %v1759 = vpop.f32.mrb[0].mxu0
    %1760 = vdwg.mxu0
    %1761 = vmatprep.subr.bf16.mxu0 0
    %1762 = vmatpush1.bf16.msra.mxu0 %v1674
    %1763 = vmatprep.subr.bf16.mxu0 0
    %1764 = vmatpush1.bf16.msra.mxu0 %v1677
    %1765 = vmatprep.subr.bf16.mxu0 0
    %1766 = vmatpush1.bf16.msra.mxu0 %v1680
    %1767 = vmatprep.subr.bf16.mxu0 0
    %1768 = vmatpush1.bf16.msra.mxu0 %v1683
    %1769 = vmatprep.subr.bf16.mxu0 0
    %1770 = vmatpush1.bf16.msra.mxu0 %v1686
    %1771 = vmatprep.subr.bf16.mxu0 0
    %1772 = vmatpush1.bf16.msra.mxu0 %v1689
    %1773 = vmatprep.subr.bf16.mxu0 0
    %1774 = vmatpush1.bf16.msra.mxu0 %v1692
    %1775 = vmatprep.subr.bf16.mxu0 0
    %1776 = vmatpush1.bf16.msra.mxu0 %v1695
    %1777 = vmatprep.subr.bf16.mxu0 0
    %1778 = vmatpush1.bf16.msra.mxu0 0
    %1779 = vmatprep.subr.bf16.mxu0 0
    %1780 = vmatpush1.bf16.msra.mxu0 0
    %1781 = vmatprep.subr.bf16.mxu0 0
    %1782 = vmatpush1.bf16.msra.mxu0 0
    %1783 = vmatprep.subr.bf16.mxu0 0
    %1784 = vmatpush1.bf16.msra.mxu0 0
    %1785 = vmatprep.subr.bf16.mxu0 0
    %1786 = vmatpush1.bf16.msra.mxu0 0
    %1787 = vmatprep.subr.bf16.mxu0 0
    %1788 = vmatpush1.bf16.msra.mxu0 0
    %1789 = vmatprep.subr.bf16.mxu0 0
    %1790 = vmatpush1.bf16.msra.mxu0 0
    %1791 = vmatprep.subr.bf16.mxu0 0
    %1792 = vmatpush1.bf16.msra.mxu0 0
    %1793 = vmatprep.mubr.bf16.mxu0 0
    %1794 = vmatmul.mubr.bf16.gmra.mrb[0].mxu0 %v1542
    %v1795 = vpop.f32.mrb[0].mxu0
    %v1796 = vadd.f32 %v1588, %v1795
    %v1797 = vpop.f32.mrb[0].mxu0
    %v1798 = vpop.f32.mrb[0].mxu0
    %v1799 = vpop.f32.mrb[0].mxu0
    %1800 = vdwg.mxu0
    %v1801 = vadd.f32 %v1539, %v1755
    %v1802 = vxor.u32 %v1801, 2147483648
    %v1803 = vmul.f32 %v1802, 1.442695
    %v1804 = vpow.pop %v1803
    %v1805 = vadd.f32 %v1804, 1.0
    %v1806 = vrcp.pop %v1805
    %v1807 = vmul.f32 1.0, %v1806
    %v1808 = vadd.f32 %v1540, %v1757
    %v1809 = vxor.u32 %v1808, 2147483648
    %v1810 = vmul.f32 %v1809, 1.442695
    %v1811 = vpow.pop %v1810
    %v1812 = vadd.f32 %v1811, 1.0
    %v1813 = vrcp.pop %v1812
    %v1814 = vmul.f32 1.0, %v1813
    %v1815 = vmul.f32 %v1807, %v1796
    %v1816 = vadd.f32 %v1541, %v1815
    %v1817 = vtanh.pop %v1816
    %v1818 = vsub.f32 1.0, %v1814
    %v1819 = vmul.f32 %v1818, %v1817
    %v1820 = vmul.f32 %v1814, %v1037
    %v1821 = vadd.f32 %v1819, %v1820
    %1822 = vst [vmem:[#allocation18] sm:$0xff] %v1821
    %v1823 = vpack.c.bf16 %v1821, %v1821
    %s1824 = scalar_lea.vmem [#allocation18], 8
    %v1825 = vld [vmem:[%s1824] sm:$0xff]
    %v1826 = vld [vmem:[#allocation13] sm:$0xff]
    %v1827 = vld [vmem:[#allocation13 + $0x8] sm:$0xf]
    %v1828 = vld [vmem:[#allocation13 + $0xc] sm:$0xff]
    %v1829 = vld [vmem:[#allocation13 + $0x14] sm:$0xf]
    %v1830 = vld [vmem:[#allocation13 + $0x18] sm:$0xff]
    %v1831 = vld [vmem:[#allocation13 + $0x20] sm:$0xf]
    %v1832 = vld [vmem:[#allocation13 + $0x24] sm:$0xff]
    %v1833 = vld [vmem:[#allocation13 + $0x2c] sm:$0xf]
    %v1834 = vld [vmem:[#allocation13 + $0x30] sm:$0xff]
    %v1835 = vld [vmem:[#allocation13 + $0x38] sm:$0xf]
    %v1836 = vld [vmem:[#allocation13 + $0x3c] sm:$0xff]
    %v1837 = vld [vmem:[#allocation13 + $0x44] sm:$0xf]
    %v1838 = vld [vmem:[#allocation13 + $0x48] sm:$0xff]
    %v1839 = vld [vmem:[#allocation13 + $0x50] sm:$0xf]
    %v1840 = vld [vmem:[#allocation13 + $0x54] sm:$0xff]
    %v1841 = vld [vmem:[#allocation13 + $0x5c] sm:$0xf]
    %v1842 = vld [vmem:[#allocation13 + $0x60] sm:$0xff]
    %v1843 = vld [vmem:[#allocation13 + $0x68] sm:$0xf]
    %v1844 = vld [vmem:[#allocation13 + $0x6c] sm:$0xff]
    %v1845 = vld [vmem:[#allocation13 + $0x74] sm:$0xf]
    %v1846 = vld [vmem:[#allocation13 + $0x78] sm:$0xff]
    %v1847 = vld [vmem:[#allocation13 + $0x80] sm:$0xf]
    %v1848 = vld [vmem:[#allocation13 + $0x84] sm:$0xff]
    %v1849 = vld [vmem:[#allocation13 + $0x8c] sm:$0xf]
    %v1850 = vld [vmem:[#allocation13 + $0x90] sm:$0xff]
    %v1851 = vld [vmem:[#allocation13 + $0x98] sm:$0xf]
    %v1852 = vld [vmem:[#allocation13 + $0x9c] sm:$0xff]
    %v1853 = vld [vmem:[#allocation13 + $0xa4] sm:$0xf]
    %v1854 = vld [vmem:[#allocation13 + $0xa8] sm:$0xff]
    %v1855 = vld [vmem:[#allocation13 + $0xb0] sm:$0xf]
    %v1856 = vld [vmem:[#allocation13 + $0xb4] sm:$0xff]
    %v1857 = vld [vmem:[#allocation13 + $0xbc] sm:$0xf]
    %v1858 = vld [vmem:[%s10 + $0x9] sm:$0x7]
    %v1860 = vlaneseq
    %v1861 = vshrl.u32 %v1860, 7
    %v1862 = vsub.s32 0, %v1861
    %v1863 = vrot.slane %v1858, %v1862
    %v1864 = vlaneseq
    %v1865 = vshrl.u32 %v1864, 7
    %v1866 = vsub.s32 1, %v1865
    %v1867 = vrot.slane %v1858, %v1866
    %v1868 = vlaneseq
    %v1869 = vshrl.u32 %v1868, 7
    %v1870 = vsub.s32 2, %v1869
    %v1871 = vrot.slane %v1858, %v1870
    %v1907 = vunpack.c.l.b16 %v1826
    %v1908 = vunpack.c.h.b16 %v1826
    %v1909 = vunpack.c.l.b16 %v1827
    %v1910 = vunpack.c.l.b16 %v1828
    %v1911 = vunpack.c.h.b16 %v1828
    %v1912 = vunpack.c.l.b16 %v1829
    %v1913 = vunpack.c.l.b16 %v1830
    %v1914 = vunpack.c.h.b16 %v1830
    %v1915 = vunpack.c.l.b16 %v1831
    %v1916 = vunpack.c.l.b16 %v1832
    %v1917 = vunpack.c.h.b16 %v1832
    %v1918 = vunpack.c.l.b16 %v1833
    %v1919 = vunpack.c.l.b16 %v1834
    %v1920 = vunpack.c.h.b16 %v1834
    %v1921 = vunpack.c.l.b16 %v1835
    %v1922 = vunpack.c.l.b16 %v1836
    %v1923 = vunpack.c.h.b16 %v1836
    %v1924 = vunpack.c.l.b16 %v1837
    %v1925 = vunpack.c.l.b16 %v1838
    %v1926 = vunpack.c.h.b16 %v1838
    %v1927 = vunpack.c.l.b16 %v1839
    %v1928 = vunpack.c.l.b16 %v1840
    %v1929 = vunpack.c.h.b16 %v1840
    %v1930 = vunpack.c.l.b16 %v1841
    %v1931 = vunpack.c.l.b16 %v1842
    %v1932 = vunpack.c.h.b16 %v1842
    %v1933 = vunpack.c.l.b16 %v1843
    %v1934 = vunpack.c.l.b16 %v1844
    %v1935 = vunpack.c.h.b16 %v1844
    %v1936 = vunpack.c.l.b16 %v1845
    %v1937 = vunpack.c.l.b16 %v1846
    %v1938 = vunpack.c.h.b16 %v1846
    %v1939 = vunpack.c.l.b16 %v1847
    %v1940 = vunpack.c.l.b16 %v1848
    %v1941 = vunpack.c.h.b16 %v1848
    %v1942 = vunpack.c.l.b16 %v1849
    %v1943 = vunpack.c.l.b16 %v1850
    %v1944 = vunpack.c.h.b16 %v1850
    %v1945 = vunpack.c.l.b16 %v1851
    %v1946 = vunpack.c.l.b16 %v1852
    %v1947 = vunpack.c.h.b16 %v1852
    %v1948 = vunpack.c.l.b16 %v1853
    %v1949 = vunpack.c.l.b16 %v1854
    %v1950 = vunpack.c.h.b16 %v1854
    %v1951 = vunpack.c.l.b16 %v1855
    %v1952 = vunpack.c.l.b16 %v1856
    %v1953 = vunpack.c.h.b16 %v1856
    %v1954 = vunpack.c.l.b16 %v1857
    %v1955 = vpack.c.b16 %v1910, %v1907
    %v1956 = vpack.c.b16 %v1911, %v1908
    %v1957 = vpack.c.b16 %v1912, %v1909
    %v1958 = vpack.c.b16 %v1916, %v1913
    %v1959 = vpack.c.b16 %v1917, %v1914
    %v1960 = vpack.c.b16 %v1918, %v1915
    %v1961 = vpack.c.b16 %v1922, %v1919
    %v1962 = vpack.c.b16 %v1923, %v1920
    %v1963 = vpack.c.b16 %v1924, %v1921
    %v1964 = vpack.c.b16 %v1928, %v1925
    %v1965 = vpack.c.b16 %v1929, %v1926
    %v1966 = vpack.c.b16 %v1930, %v1927
    %v1967 = vpack.c.b16 %v1934, %v1931
    %v1968 = vpack.c.b16 %v1935, %v1932
    %v1969 = vpack.c.b16 %v1936, %v1933
    %v1970 = vpack.c.b16 %v1940, %v1937
    %v1971 = vpack.c.b16 %v1941, %v1938
    %v1972 = vpack.c.b16 %v1942, %v1939
    %v1973 = vpack.c.b16 %v1946, %v1943
    %v1974 = vpack.c.b16 %v1947, %v1944
    %v1975 = vpack.c.b16 %v1948, %v1945
    %v1976 = vpack.c.b16 %v1952, %v1949
    %v1977 = vpack.c.b16 %v1953, %v1950
    %v1978 = vpack.c.b16 %v1954, %v1951
    %2003 = vmatprep.subr.bf16.mxu0 %v1956
    %2004 = vmatpush1.bf16.msra.mxu0 %v1955
    %2005 = vmatprep.subr.bf16.mxu0 %v1959
    %2006 = vmatpush1.bf16.msra.mxu0 %v1958
    %2007 = vmatprep.subr.bf16.mxu0 %v1962
    %2008 = vmatpush1.bf16.msra.mxu0 %v1961
    %2009 = vmatprep.subr.bf16.mxu0 %v1965
    %2010 = vmatpush1.bf16.msra.mxu0 %v1964
    %2011 = vmatprep.subr.bf16.mxu0 %v1968
    %2012 = vmatpush1.bf16.msra.mxu0 %v1967
    %2013 = vmatprep.subr.bf16.mxu0 %v1971
    %2014 = vmatpush1.bf16.msra.mxu0 %v1970
    %2015 = vmatprep.subr.bf16.mxu0 %v1974
    %2016 = vmatpush1.bf16.msra.mxu0 %v1973
    %2017 = vmatprep.subr.bf16.mxu0 %v1977
    %2018 = vmatpush1.bf16.msra.mxu0 %v1976
    %2019 = vmatprep.subr.bf16.mxu0 0
    %2020 = vmatpush1.bf16.msra.mxu0 0
    %2021 = vmatprep.subr.bf16.mxu0 0
    %2022 = vmatpush1.bf16.msra.mxu0 0
    %2023 = vmatprep.subr.bf16.mxu0 0
    %2024 = vmatpush1.bf16.msra.mxu0 0
    %2025 = vmatprep.subr.bf16.mxu0 0
    %2026 = vmatpush1.bf16.msra.mxu0 0
    %2027 = vmatprep.subr.bf16.mxu0 0
    %2028 = vmatpush1.bf16.msra.mxu0 0
    %2029 = vmatprep.subr.bf16.mxu0 0
    %2030 = vmatpush1.bf16.msra.mxu0 0
    %2031 = vmatprep.subr.bf16.mxu0 0
    %2032 = vmatpush1.bf16.msra.mxu0 0
    %2033 = vmatprep.subr.bf16.mxu0 0
    %2034 = vmatpush1.bf16.msra.mxu0 0
    %2035 = vmatprep.mubr.bf16.mxu0 0
    %2036 = vmatmul.mubr.bf16.gmra.mrb[0].mxu0 %v1823
    %v2037 = vpop.f32.mrb[0].mxu0
    %v2038 = vadd.f32 %v1863, %v2037
    %v2039 = vpop.f32.mrb[0].mxu0
    %v2040 = vadd.f32 %v1867, %v2039
    %v2041 = vpop.f32.mrb[0].mxu0
    %v2042 = vpop.f32.mrb[0].mxu0
    %2043 = vdwg.mxu0
    %2044 = vmatprep.subr.bf16.mxu0 0
    %2045 = vmatpush1.bf16.msra.mxu0 %v1957
    %2046 = vmatprep.subr.bf16.mxu0 0
    %2047 = vmatpush1.bf16.msra.mxu0 %v1960
    %2048 = vmatprep.subr.bf16.mxu0 0
    %2049 = vmatpush1.bf16.msra.mxu0 %v1963
    %2050 = vmatprep.subr.bf16.mxu0 0
    %2051 = vmatpush1.bf16.msra.mxu0 %v1966
    %2052 = vmatprep.subr.bf16.mxu0 0
    %2053 = vmatpush1.bf16.msra.mxu0 %v1969
    %2054 = vmatprep.subr.bf16.mxu0 0
    %2055 = vmatpush1.bf16.msra.mxu0 %v1972
    %2056 = vmatprep.subr.bf16.mxu0 0
    %2057 = vmatpush1.bf16.msra.mxu0 %v1975
    %2058 = vmatprep.subr.bf16.mxu0 0
    %2059 = vmatpush1.bf16.msra.mxu0 %v1978
    %2060 = vmatprep.subr.bf16.mxu0 0
    %2061 = vmatpush1.bf16.msra.mxu0 0
    %2062 = vmatprep.subr.bf16.mxu0 0
    %2063 = vmatpush1.bf16.msra.mxu0 0
    %2064 = vmatprep.subr.bf16.mxu0 0
    %2065 = vmatpush1.bf16.msra.mxu0 0
    %2066 = vmatprep.subr.bf16.mxu0 0
    %2067 = vmatpush1.bf16.msra.mxu0 0
    %2068 = vmatprep.subr.bf16.mxu0 0
    %2069 = vmatpush1.bf16.msra.mxu0 0
    %2070 = vmatprep.subr.bf16.mxu0 0
    %2071 = vmatpush1.bf16.msra.mxu0 0
    %2072 = vmatprep.subr.bf16.mxu0 0
    %2073 = vmatpush1.bf16.msra.mxu0 0
    %2074 = vmatprep.subr.bf16.mxu0 0
    %2075 = vmatpush1.bf16.msra.mxu0 0
    %2076 = vmatprep.mubr.bf16.mxu0 0
    %2077 = vmatmul.mubr.bf16.gmra.mrb[0].mxu0 %v1823
    %v2078 = vpop.f32.mrb[0].mxu0
    %v2079 = vadd.f32 %v1871, %v2078
    %v2080 = vpop.f32.mrb[0].mxu0
    %v2081 = vpop.f32.mrb[0].mxu0
    %v2082 = vpop.f32.mrb[0].mxu0
    %2083 = vdwg.mxu0
    %v2084 = vpack.c.bf16 %v1825, %v1825
    %s2085 = scalar_lea.vmem [#allocation14], 192
    %v2086 = vld [vmem:[%s2085] sm:$0xff]
    %v2087 = vld [vmem:[%s2085 + $0x8] sm:$0xf]
    %v2088 = vld [vmem:[%s2085 + $0xc] sm:$0xff]
    %v2089 = vld [vmem:[%s2085 + $0x14] sm:$0xf]
    %v2090 = vld [vmem:[%s2085 + $0x18] sm:$0xff]
    %v2091 = vld [vmem:[%s2085 + $0x20] sm:$0xf]
    %v2092 = vld [vmem:[%s2085 + $0x24] sm:$0xff]
    %v2093 = vld [vmem:[%s2085 + $0x2c] sm:$0xf]
    %v2094 = vld [vmem:[%s2085 + $0x30] sm:$0xff]
    %v2095 = vld [vmem:[%s2085 + $0x38] sm:$0xf]
    %v2096 = vld [vmem:[%s2085 + $0x3c] sm:$0xff]
    %v2097 = vld [vmem:[%s2085 + $0x44] sm:$0xf]
    %v2098 = vld [vmem:[%s2085 + $0x48] sm:$0xff]
    %v2099 = vld [vmem:[%s2085 + $0x50] sm:$0xf]
    %v2100 = vld [vmem:[%s2085 + $0x54] sm:$0xff]
    %v2101 = vld [vmem:[%s2085 + $0x5c] sm:$0xf]
    %v2102 = vld [vmem:[%s2085 + $0x60] sm:$0xff]
    %v2103 = vld [vmem:[%s2085 + $0x68] sm:$0xf]
    %v2104 = vld [vmem:[%s2085 + $0x6c] sm:$0xff]
    %v2105 = vld [vmem:[%s2085 + $0x74] sm:$0xf]
    %v2106 = vld [vmem:[%s2085 + $0x78] sm:$0xff]
    %v2107 = vld [vmem:[%s2085 + $0x80] sm:$0xf]
    %v2108 = vld [vmem:[%s2085 + $0x84] sm:$0xff]
    %v2109 = vld [vmem:[%s2085 + $0x8c] sm:$0xf]
    %v2110 = vld [vmem:[%s2085 + $0x90] sm:$0xff]
    %v2111 = vld [vmem:[%s2085 + $0x98] sm:$0xf]
    %v2112 = vld [vmem:[%s2085 + $0x9c] sm:$0xff]
    %v2113 = vld [vmem:[%s2085 + $0xa4] sm:$0xf]
    %v2114 = vld [vmem:[%s2085 + $0xa8] sm:$0xff]
    %v2115 = vld [vmem:[%s2085 + $0xb0] sm:$0xf]
    %v2116 = vld [vmem:[%s2085 + $0xb4] sm:$0xff]
    %v2117 = vld [vmem:[%s2085 + $0xbc] sm:$0xf]
    %v2118 = vld [vmem:[%s10 + $0xc] sm:$0x7]
    %v2120 = vlaneseq
    %v2121 = vshrl.u32 %v2120, 7
    %v2122 = vsub.s32 0, %v2121
    %v2123 = vrot.slane %v2118, %v2122
    %v2124 = vlaneseq
    %v2125 = vshrl.u32 %v2124, 7
    %v2126 = vsub.s32 1, %v2125
    %v2127 = vrot.slane %v2118, %v2126
    %v2128 = vlaneseq
    %v2129 = vshrl.u32 %v2128, 7
    %v2130 = vsub.s32 2, %v2129
    %v2131 = vrot.slane %v2118, %v2130
    %v2167 = vunpack.c.l.b16 %v2086
    %v2168 = vunpack.c.h.b16 %v2086
    %v2169 = vunpack.c.l.b16 %v2087
    %v2170 = vunpack.c.l.b16 %v2088
    %v2171 = vunpack.c.h.b16 %v2088
    %v2172 = vunpack.c.l.b16 %v2089
    %v2173 = vunpack.c.l.b16 %v2090
    %v2174 = vunpack.c.h.b16 %v2090
    %v2175 = vunpack.c.l.b16 %v2091
    %v2176 = vunpack.c.l.b16 %v2092
    %v2177 = vunpack.c.h.b16 %v2092
    %v2178 = vunpack.c.l.b16 %v2093
    %v2179 = vunpack.c.l.b16 %v2094
    %v2180 = vunpack.c.h.b16 %v2094
    %v2181 = vunpack.c.l.b16 %v2095
    %v2182 = vunpack.c.l.b16 %v2096
    %v2183 = vunpack.c.h.b16 %v2096
    %v2184 = vunpack.c.l.b16 %v2097
    %v2185 = vunpack.c.l.b16 %v2098
    %v2186 = vunpack.c.h.b16 %v2098
    %v2187 = vunpack.c.l.b16 %v2099
    %v2188 = vunpack.c.l.b16 %v2100
    %v2189 = vunpack.c.h.b16 %v2100
    %v2190 = vunpack.c.l.b16 %v2101
    %v2191 = vunpack.c.l.b16 %v2102
    %v2192 = vunpack.c.h.b16 %v2102
    %v2193 = vunpack.c.l.b16 %v2103
    %v2194 = vunpack.c.l.b16 %v2104
    %v2195 = vunpack.c.h.b16 %v2104
    %v2196 = vunpack.c.l.b16 %v2105
    %v2197 = vunpack.c.l.b16 %v2106
    %v2198 = vunpack.c.h.b16 %v2106
    %v2199 = vunpack.c.l.b16 %v2107
    %v2200 = vunpack.c.l.b16 %v2108
    %v2201 = vunpack.c.h.b16 %v2108
    %v2202 = vunpack.c.l.b16 %v2109
    %v2203 = vunpack.c.l.b16 %v2110
    %v2204 = vunpack.c.h.b16 %v2110
    %v2205 = vunpack.c.l.b16 %v2111
    %v2206 = vunpack.c.l.b16 %v2112
    %v2207 = vunpack.c.h.b16 %v2112
    %v2208 = vunpack.c.l.b16 %v2113
    %v2209 = vunpack.c.l.b16 %v2114
    %v2210 = vunpack.c.h.b16 %v2114
    %v2211 = vunpack.c.l.b16 %v2115
    %v2212 = vunpack.c.l.b16 %v2116
    %v2213 = vunpack.c.h.b16 %v2116
    %v2214 = vunpack.c.l.b16 %v2117
    %v2215 = vpack.c.b16 %v2170, %v2167
    %v2216 = vpack.c.b16 %v2171, %v2168
    %v2217 = vpack.c.b16 %v2172, %v2169
    %v2218 = vpack.c.b16 %v2176, %v2173
    %v2219 = vpack.c.b16 %v2177, %v2174
    %v2220 = vpack.c.b16 %v2178, %v2175
    %v2221 = vpack.c.b16 %v2182, %v2179
    %v2222 = vpack.c.b16 %v2183, %v2180
    %v2223 = vpack.c.b16 %v2184, %v2181
    %v2224 = vpack.c.b16 %v2188, %v2185
    %v2225 = vpack.c.b16 %v2189, %v2186
    %v2226 = vpack.c.b16 %v2190, %v2187
    %v2227 = vpack.c.b16 %v2194, %v2191
    %v2228 = vpack.c.b16 %v2195, %v2192
    %v2229 = vpack.c.b16 %v2196, %v2193
    %v2230 = vpack.c.b16 %v2200, %v2197
    %v2231 = vpack.c.b16 %v2201, %v2198
    %v2232 = vpack.c.b16 %v2202, %v2199
    %v2233 = vpack.c.b16 %v2206, %v2203
    %v2234 = vpack.c.b16 %v2207, %v2204
    %v2235 = vpack.c.b16 %v2208, %v2205
    %v2236 = vpack.c.b16 %v2212, %v2209
    %v2237 = vpack.c.b16 %v2213, %v2210
    %v2238 = vpack.c.b16 %v2214, %v2211
    %2263 = vmatprep.subr.bf16.mxu0 %v2216
    %2264 = vmatpush1.bf16.msra.mxu0 %v2215
    %2265 = vmatprep.subr.bf16.mxu0 %v2219
    %2266 = vmatpush1.bf16.msra.mxu0 %v2218
    %2267 = vmatprep.subr.bf16.mxu0 %v2222
    %2268 = vmatpush1.bf16.msra.mxu0 %v2221
    %2269 = vmatprep.subr.bf16.mxu0 %v2225
    %2270 = vmatpush1.bf16.msra.mxu0 %v2224
    %2271 = vmatprep.subr.bf16.mxu0 %v2228
    %2272 = vmatpush1.bf16.msra.mxu0 %v2227
    %2273 = vmatprep.subr.bf16.mxu0 %v2231
    %2274 = vmatpush1.bf16.msra.mxu0 %v2230
    %2275 = vmatprep.subr.bf16.mxu0 %v2234
    %2276 = vmatpush1.bf16.msra.mxu0 %v2233
    %2277 = vmatprep.subr.bf16.mxu0 %v2237
    %2278 = vmatpush1.bf16.msra.mxu0 %v2236
    %2279 = vmatprep.subr.bf16.mxu0 0
    %2280 = vmatpush1.bf16.msra.mxu0 0
    %2281 = vmatprep.subr.bf16.mxu0 0
    %2282 = vmatpush1.bf16.msra.mxu0 0
    %2283 = vmatprep.subr.bf16.mxu0 0
    %2284 = vmatpush1.bf16.msra.mxu0 0
    %2285 = vmatprep.subr.bf16.mxu0 0
    %2286 = vmatpush1.bf16.msra.mxu0 0
    %2287 = vmatprep.subr.bf16.mxu0 0
    %2288 = vmatpush1.bf16.msra.mxu0 0
    %2289 = vmatprep.subr.bf16.mxu0 0
    %2290 = vmatpush1.bf16.msra.mxu0 0
    %2291 = vmatprep.subr.bf16.mxu0 0
    %2292 = vmatpush1.bf16.msra.mxu0 0
    %2293 = vmatprep.subr.bf16.mxu0 0
    %2294 = vmatpush1.bf16.msra.mxu0 0
    %2295 = vmatprep.mubr.bf16.mxu0 0
    %2296 = vmatmul.mubr.bf16.gmra.mrb[0].mxu0 %v2084
    %v2297 = vpop.f32.mrb[0].mxu0
    %v2298 = vadd.f32 %v2123, %v2297
    %v2299 = vpop.f32.mrb[0].mxu0
    %v2300 = vadd.f32 %v2127, %v2299
    %v2301 = vpop.f32.mrb[0].mxu0
    %v2302 = vpop.f32.mrb[0].mxu0
    %2303 = vdwg.mxu0
    %2304 = vmatprep.subr.bf16.mxu0 0
    %2305 = vmatpush1.bf16.msra.mxu0 %v2217
    %2306 = vmatprep.subr.bf16.mxu0 0
    %2307 = vmatpush1.bf16.msra.mxu0 %v2220
    %2308 = vmatprep.subr.bf16.mxu0 0
    %2309 = vmatpush1.bf16.msra.mxu0 %v2223
    %2310 = vmatprep.subr.bf16.mxu0 0
    %2311 = vmatpush1.bf16.msra.mxu0 %v2226
    %2312 = vmatprep.subr.bf16.mxu0 0
    %2313 = vmatpush1.bf16.msra.mxu0 %v2229
    %2314 = vmatprep.subr.bf16.mxu0 0
    %2315 = vmatpush1.bf16.msra.mxu0 %v2232
    %2316 = vmatprep.subr.bf16.mxu0 0
    %2317 = vmatpush1.bf16.msra.mxu0 %v2235
    %2318 = vmatprep.subr.bf16.mxu0 0
    %2319 = vmatpush1.bf16.msra.mxu0 %v2238
    %2320 = vmatprep.subr.bf16.mxu0 0
    %2321 = vmatpush1.bf16.msra.mxu0 0
    %2322 = vmatprep.subr.bf16.mxu0 0
    %2323 = vmatpush1.bf16.msra.mxu0 0
    %2324 = vmatprep.subr.bf16.mxu0 0
    %2325 = vmatpush1.bf16.msra.mxu0 0
    %2326 = vmatprep.subr.bf16.mxu0 0
    %2327 = vmatpush1.bf16.msra.mxu0 0
    %2328 = vmatprep.subr.bf16.mxu0 0
    %2329 = vmatpush1.bf16.msra.mxu0 0
    %2330 = vmatprep.subr.bf16.mxu0 0
    %2331 = vmatpush1.bf16.msra.mxu0 0
    %2332 = vmatprep.subr.bf16.mxu0 0
    %2333 = vmatpush1.bf16.msra.mxu0 0
    %2334 = vmatprep.subr.bf16.mxu0 0
    %2335 = vmatpush1.bf16.msra.mxu0 0
    %2336 = vmatprep.mubr.bf16.mxu0 0
    %2337 = vmatmul.mubr.bf16.gmra.mrb[0].mxu0 %v2084
    %v2338 = vpop.f32.mrb[0].mxu0
    %v2339 = vadd.f32 %v2131, %v2338
    %v2340 = vpop.f32.mrb[0].mxu0
    %v2341 = vpop.f32.mrb[0].mxu0
    %v2342 = vpop.f32.mrb[0].mxu0
    %2343 = vdwg.mxu0
    %v2344 = vadd.f32 %v2038, %v2298
    %v2345 = vxor.u32 %v2344, 2147483648
    %v2346 = vmul.f32 %v2345, 1.442695
    %v2347 = vpow.pop %v2346
    %v2348 = vadd.f32 %v2347, 1.0
    %v2349 = vrcp.pop %v2348
    %v2350 = vmul.f32 1.0, %v2349
    %v2351 = vadd.f32 %v2040, %v2300
    %v2352 = vxor.u32 %v2351, 2147483648
    %v2353 = vmul.f32 %v2352, 1.442695
    %v2354 = vpow.pop %v2353
    %v2355 = vadd.f32 %v2354, 1.0
    %v2356 = vrcp.pop %v2355
    %v2357 = vmul.f32 1.0, %v2356
    %v2358 = vmul.f32 %v2350, %v2339
    %v2359 = vadd.f32 %v2079, %v2358
    %v2360 = vtanh.pop %v2359
    %v2361 = vsub.f32 1.0, %v2357
    %v2362 = vmul.f32 %v2361, %v2360
    %v2363 = vmul.f32 %v2357, %v1825
    %v2364 = vadd.f32 %v2362, %v2363
    %2365 = vst [vmem:[%s1824] sm:$0xff] %v2364
    %v2366 = vpack.c.bf16 %v2364, %v2364
    %v2367 = vld [vmem:[#allocation16] sm:$0xf]
    %v2368 = vld [vmem:[#allocation16 + $0x4] sm:$0xf]
    %v2369 = vld [vmem:[#allocation16 + $0x8] sm:$0xf]
    %v2370 = vld [vmem:[#allocation16 + $0xc] sm:$0xf]
    %v2371 = vld [vmem:[#allocation16 + $0x10] sm:$0xf]
    %v2372 = vld [vmem:[#allocation16 + $0x14] sm:$0xf]
    %v2373 = vld [vmem:[#allocation16 + $0x18] sm:$0xf]
    %v2374 = vld [vmem:[#allocation16 + $0x1c] sm:$0xf]
    %v2375 = vld [vmem:[#allocation16 + $0x20] sm:$0xf]
    %v2376 = vld [vmem:[#allocation16 + $0x24] sm:$0xf]
    %v2377 = vld [vmem:[#allocation16 + $0x28] sm:$0xf]
    %v2378 = vld [vmem:[#allocation16 + $0x2c] sm:$0xf]
    %v2379 = vld [vmem:[#allocation16 + $0x30] sm:$0xf]
    %v2380 = vld [vmem:[#allocation16 + $0x34] sm:$0xf]
    %v2381 = vld [vmem:[#allocation16 + $0x38] sm:$0xf]
    %v2382 = vld [vmem:[#allocation16 + $0x3c] sm:$0xf]
    %v2383 = vld [vmem:[%s10 + $0xf] sm:$0x1]
    %v2385 = vlaneseq
    %v2386 = vshrl.u32 %v2385, 7
    %v2387 = vsub.s32 0, %v2386
    %v2388 = vrot.slane %v2383, %v2387
    %v2406 = vunpack.c.l.b16 %v2367
    %v2407 = vunpack.c.l.b16 %v2368
    %v2408 = vunpack.c.l.b16 %v2369
    %v2409 = vunpack.c.l.b16 %v2370
    %v2410 = vunpack.c.l.b16 %v2371
    %v2411 = vunpack.c.l.b16 %v2372
    %v2412 = vunpack.c.l.b16 %v2373
    %v2413 = vunpack.c.l.b16 %v2374
    %v2414 = vunpack.c.l.b16 %v2375
    %v2415 = vunpack.c.l.b16 %v2376
    %v2416 = vunpack.c.l.b16 %v2377
    %v2417 = vunpack.c.l.b16 %v2378
    %v2418 = vunpack.c.l.b16 %v2379
    %v2419 = vunpack.c.l.b16 %v2380
    %v2420 = vunpack.c.l.b16 %v2381
    %v2421 = vunpack.c.l.b16 %v2382
    %v2422 = vpack.c.b16 %v2407, %v2406
    %v2423 = vpack.c.b16 %v2409, %v2408
    %v2424 = vpack.c.b16 %v2411, %v2410
    %v2425 = vpack.c.b16 %v2413, %v2412
    %v2426 = vpack.c.b16 %v2415, %v2414
    %v2427 = vpack.c.b16 %v2417, %v2416
    %v2428 = vpack.c.b16 %v2419, %v2418
    %v2429 = vpack.c.b16 %v2421, %v2420
    %2438 = vmatprep.subr.bf16.mxu0 0
    %2439 = vmatpush1.bf16.msra.mxu0 %v2422
    %2440 = vmatprep.subr.bf16.mxu0 0
    %2441 = vmatpush1.bf16.msra.mxu0 %v2423
    %2442 = vmatprep.subr.bf16.mxu0 0
    %2443 = vmatpush1.bf16.msra.mxu0 %v2424
    %2444 = vmatprep.subr.bf16.mxu0 0
    %2445 = vmatpush1.bf16.msra.mxu0 %v2425
    %2446 = vmatprep.subr.bf16.mxu0 0
    %2447 = vmatpush1.bf16.msra.mxu0 %v2426
    %2448 = vmatprep.subr.bf16.mxu0 0
    %2449 = vmatpush1.bf16.msra.mxu0 %v2427
    %2450 = vmatprep.subr.bf16.mxu0 0
    %2451 = vmatpush1.bf16.msra.mxu0 %v2428
    %2452 = vmatprep.subr.bf16.mxu0 0
    %2453 = vmatpush1.bf16.msra.mxu0 %v2429
    %2454 = vmatprep.subr.bf16.mxu0 0
    %2455 = vmatpush1.bf16.msra.mxu0 0
    %2456 = vmatprep.subr.bf16.mxu0 0
    %2457 = vmatpush1.bf16.msra.mxu0 0
    %2458 = vmatprep.subr.bf16.mxu0 0
    %2459 = vmatpush1.bf16.msra.mxu0 0
    %2460 = vmatprep.subr.bf16.mxu0 0
    %2461 = vmatpush1.bf16.msra.mxu0 0
    %2462 = vmatprep.subr.bf16.mxu0 0
    %2463 = vmatpush1.bf16.msra.mxu0 0
    %2464 = vmatprep.subr.bf16.mxu0 0
    %2465 = vmatpush1.bf16.msra.mxu0 0
    %2466 = vmatprep.subr.bf16.mxu0 0
    %2467 = vmatpush1.bf16.msra.mxu0 0
    %2468 = vmatprep.subr.bf16.mxu0 0
    %2469 = vmatpush1.bf16.msra.mxu0 0
    %2470 = vmatprep.mubr.bf16.mxu0 0
    %2471 = vmatmul.mubr.bf16.gmra.mrb[0].mxu0 %v2366
    %v2472 = vpop.f32.mrb[0].mxu0
    %v2473 = vadd.f32 %v2388, %v2472
    %v2474 = vpop.f32.mrb[0].mxu0
    %v2475 = vpop.f32.mrb[0].mxu0
    %v2476 = vpop.f32.mrb[0].mxu0
    %2477 = vdwg.mxu0
    %2478 = vst [vmem:[#allocation17] sm:$0xff] %v2473
    // Predicated region
    $region86: #{tpu_custom_call.1} parent=1 // pred_check
      _
    $region87: #{tpu_custom_call.1} parent=1 // pred_check_branch
      %2480 = sbr.rel (0) target = $region89
    $region88: #{tpu_custom_call.1} parent=1 // pred_region
      %s2482 = ssub.s32 128, 128
      %2483 = vsyncadd [#allocation4], %s2482
      %s2485 = sshll.u32 [#allocation17], 4
      %s2486 = int_to_ptr.vmem [resolvable:$true] %s2485
      %2488 = dma.vmem_to_hbm [thread:$0]  %s2486, 128, %s11, [#allocation4]
    $region89: #{tpu_custom_call.1} parent=1 // pred_fallthru
      _
    // Predicated region
    $region90: #{tpu_custom_call.1} parent=1 // pred_check
      _
    $region91: #{tpu_custom_call.1} parent=1 // pred_check_branch
      %2490 = sbr.rel (0) target = $region93
    $region92: #{tpu_custom_call.1} parent=1 // pred_region
      %s2492 = ssub.s32 256, 256
      %2493 = vsyncadd [#allocation19], %s2492
      %s2494 = sshll.u32 [#allocation18], 4
      %s2495 = int_to_ptr.vmem [resolvable:$true] %s2494
      %2500 = dma.vmem_to_hbm [thread:$0]  %s2495, 256, %s12, [#allocation19], 128, 128, 8
    $region93: #{tpu_custom_call.1} parent=1 // pred_fallthru
      _
    // Predicated region
    $region94: #{tpu_custom_call.1} parent=1 // pred_check
      _
    $region95: #{tpu_custom_call.1} parent=1 // pred_check_branch
      %2502 = sbr.rel (0) target = $region97
    $region96: #{tpu_custom_call.1} parent=1 // pred_region
      %2503 = dma.done [#allocation4], 128
    $region97: #{tpu_custom_call.1} parent=1 // pred_fallthru
      _
    // Predicated region
    $region98: #{tpu_custom_call.1} parent=1 // pred_check
      _
    $region99: #{tpu_custom_call.1} parent=1 // pred_check_branch
      %2505 = sbr.rel (0) target = $region101
    $region100: #{tpu_custom_call.1} parent=1 // pred_region
      %2506 = dma.done [#allocation19], 256
    $region101: #{tpu_custom_call.1} parent=1 // pred_fallthru
      _
    %2507 = vsyncpa [#allocation3], 1
    %2508 = vsyncpa [#allocation6], 1
    %2509 = vsyncpa [#allocation9], 1
    %2510 = vsyncpa [#allocation12], 1
    %2511 = vsyncpa [#allocation15], 1
    %2512 = vsyncpa [#allocation4], 1
    %2513 = vsyncpa [#allocation19], 1

</llo_original>
